<compile_context>
chip_gen: v7x
topology: tpu7x:2x2x1
jax: 0.10.0
libtpu: 0.0.40
codegen_flags: <defaults>
</compile_context>

<pallas_src>
import jax
import jax.numpy as jnp
from jax.experimental import pallas as pl
from jax.experimental.pallas import tpu as pltpu

N_HEADS = 4
LRELU_SLOPE = 0.01   # F.leaky_relu default negative_slope
GAT_SLOPE = 0.2      # GATv2 attention leaky_relu negative_slope
NEG_INF = -1e30


def _leaky_relu(x, slope):
    # valid for 0 < slope < 1
    return jnp.maximum(x, x * slope)


def _round_up(v, m=8):
    return (v + m - 1) // m * m


def _pack_params(params):
    """Pack all model parameters into a single lane-padded f32 slab [n_rows, 2*H*C]."""
    in_ch, hid = params['w0'].shape
    out_ch = params['wout'].shape[1]
    H = N_HEADS
    hc = H * hid
    width = 2 * hc                                   # fused [wl | wr] row width

    r_w0 = 0
    r_wlr0 = _round_up(r_w0 + in_ch)
    r_wlr1 = _round_up(r_wlr0 + hid)
    r_wout = _round_up(r_wlr1 + hid)
    r_bias = _round_up(r_wout + hid)                 # 6 rows: b0, blr0, bias0, blr1, bias1, bout
    r_att = _round_up(r_bias + 6)                    # [hc, *] block-diag att (layer0 @ col 0, layer1 @ col hc)
    r_e = _round_up(r_att + hc)                      # [H, hc]  head -> channel-block expander
    r_s = _round_up(r_e + H)                         # [hc, hid] head-mean collapser (1/H folded in)
    n_rows = _round_up(r_s + hc)

    f32 = jnp.float32

    def block_diag_att(att):                         # [H, hid] -> [hc, H]
        return (att[:, :, None] * jnp.eye(H, dtype=f32)[:, None, :]).reshape(hc, H)

    slab = jnp.zeros((n_rows, width), f32)
    slab = slab.at[r_w0:r_w0 + in_ch, :hid].set(params['w0'])
    slab = slab.at[r_wlr0:r_wlr0 + hid, :].set(
        jnp.concatenate([params['wl0'], params['wr0']], axis=1))
    slab = slab.at[r_wlr1:r_wlr1 + hid, :].set(
        jnp.concatenate([params['wl1'], params['wr1']], axis=1))
    slab = slab.at[r_wout:r_wout + hid, :out_ch].set(params['wout'])
    slab = slab.at[r_bias + 0, :hid].set(params['b0'][0])
    slab = slab.at[r_bias + 1, :].set(
        jnp.concatenate([params['bl0'], params['br0']], axis=1)[0])
    slab = slab.at[r_bias + 2, :hid].set(params['bias0'][0])
    slab = slab.at[r_bias + 3, :].set(
        jnp.concatenate([params['bl1'], params['br1']], axis=1)[0])
    slab = slab.at[r_bias + 4, :hid].set(params['bias1'][0])
    slab = slab.at[r_bias + 5, :out_ch].set(params['bout'][0])
    slab = slab.at[r_att:r_att + hc, 0:H].set(block_diag_att(params['att0']))
    slab = slab.at[r_att:r_att + hc, hc:hc + H].set(block_diag_att(params['att1']))
    slab = slab.at[r_e:r_e + H, 0:hc].set(jnp.repeat(jnp.eye(H, dtype=f32), hid, axis=1))
    slab = slab.at[r_s:r_s + hc, 0:hid].set(jnp.tile(jnp.eye(hid, dtype=f32), (H, 1)) / H)

    offs = dict(r_w0=r_w0, r_wlr0=r_wlr0, r_wlr1=r_wlr1, r_wout=r_wout,
                r_bias=r_bias, r_att=r_att, r_e=r_e, r_s=r_s)
    dims = dict(in_ch=in_ch, hid=hid, out_ch=out_ch)
    return slab, offs, dims


def _build_kernel(bt, n, in_ch, hid, out_pad, o):
    H = N_HEADS
    hc = H * hid
    f32 = jnp.float32

    def kernel(x_ref, mask_ref, p_ref, out_ref):
        # x_ref:    [bt, n, in_ch]
        # mask_ref: [bt, n, n]   additive mask (0 on edges, -1e30 elsewhere), mask[g, target, source]
        # p_ref:    resident weight slab
        # out_ref:  [bt, out_pad]  lane-dense output block
        x = x_ref[...].reshape(bt * n, in_ch)

        # broadcast the additive mask over heads ONCE; reused by both GAT layers.
        maskH = jnp.broadcast_to(mask_ref[...][:, :, :, None], (bt, n, n, H))

        # initial_proj + leaky_relu
        w0 = p_ref[o['r_w0']:o['r_w0'] + in_ch, 0:hid]
        b0 = p_ref[o['r_bias']:o['r_bias'] + 1, 0:hid]
        h = _leaky_relu(jnp.dot(x, w0, preferred_element_type=f32) + b0, LRELU_SLOPE)

        expand = p_ref[o['r_e']:o['r_e'] + H, 0:hc]      # [H, hc]  head -> channel-block
        headmean = p_ref[o['r_s']:o['r_s'] + hc, 0:hid]  # [hc, hid] (1/H folded)

        def gatv2(h, r_w, row_blr, row_bias, att_col):
            w_lr = p_ref[r_w:r_w + hid, :]                                   # [hid, 2*hc]
            b_lr = p_ref[row_blr:row_blr + 1, :]                             # [1, 2*hc]
            bias = p_ref[row_bias:row_bias + 1, 0:hid]                       # [1, hid]
            att_bd = p_ref[o['r_att']:o['r_att'] + hc, att_col:att_col + H]  # [hc, H]

            # fused lin_l | lin_r transform, all graphs together (single MXU pass)
            xlr = jnp.dot(h, w_lr, preferred_element_type=f32) + b_lr        # [bt*n, 2*hc]
            xl = xlr[:, 0:hc].reshape(bt, n, hc)         # source side (lin_l) = messages
            xr = xlr[:, hc:2 * hc].reshape(bt, n, hc)    # target side (lin_r)

            # all 4 heads at once: s[b, i, j, :] = leaky_relu(xr[b,i] + xl[b,j])
            s = _leaky_relu(xr[:, :, None, :] + xl[:, None, :, :], GAT_SLOPE)  # [bt,n,n,hc]
            e = jnp.dot(s.reshape(bt * n * n, hc), att_bd,
                        preferred_element_type=f32).reshape(bt, n, n, H)       # e[g,tgt,src,head]

            # masked softmax over sources (axis=2) for all heads together
            e = e + maskH
            e = e - jnp.max(e, axis=2, keepdims=True)
            num = jnp.exp(e)
            denom = jnp.sum(num, axis=2, keepdims=True)
            alpha = num * pl.reciprocal(denom, approx=True)                    # [bt,n,n,H]

            # aggregation fully on the MXU:
            #   agg[b,i,c] = sum_{j,h} alpha[b,i,j,h] * xl[b,j,c] * expand[h,c]
            xblk = (xl[:, :, None, :] * expand[None, None, :, :]).reshape(bt, n * H, hc)
            agg = jnp.einsum('bim,bmc->bic', alpha.reshape(bt, n, n * H), xblk,
                             preferred_element_type=f32)                       # [bt,n,hc]
            # head-mean (1/H folded into headmean) + bias
            return jnp.dot(agg.reshape(bt * n, hc), headmean,
                           preferred_element_type=f32) + bias                  # [bt*n, hid]

        rb = o['r_bias']
        h = _leaky_relu(gatv2(h, o['r_wlr0'], rb + 1, rb + 2, 0), LRELU_SLOPE)
        # TODO(synk): nn.Dropout(0.2) reproduced as identity (eval-mode semantics).
        h = _leaky_relu(gatv2(h, o['r_wlr1'], rb + 3, rb + 4, hc), LRELU_SLOPE)

        # output_proj (columns beyond out_ch are zero in the slab -> lane-dense store)
        wout = p_ref[o['r_wout']:o['r_wout'] + hid, 0:out_pad]
        bout = p_ref[rb + 5:rb + 6, 0:out_pad]
        out = jnp.dot(h, wout, preferred_element_type=f32) + bout              # [bt*n, out_pad]
        # per-graph node mean -> [bt, out_pad]
        out_ref[...] = jnp.mean(out.reshape(bt, n, out_pad), axis=1)

    return kernel


def cpu_arch_gat_batch(x_b, adj_b, params, block_graphs=32):
    """x_b: [B, N, in_ch]; adj_b: [B, N, N] dense 0/1 adjacency (adj[b, target, source],
    self-loops included). Returns graph embeddings [B, out_ch]."""
    slab, offs, dims = _pack_params(params)
    B, N, in_ch = x_b.shape
    hid, out_ch = dims['hid'], dims['out_ch']
    n_rows, width = slab.shape

    out_pad = _round_up(out_ch, 128)     # lane-dense output block width
    assert out_pad <= width, "out_channels too large for the packed slab width"

    # graphs per grid step; keep sublane-friendly when the batch axis is actually tiled
    bt = max(1, min(block_graphs, B))
    if bt < B:
        bt = _round_up(bt, 8)
    b_pad = -(-B // bt) * bt

    xf = x_b.astype(jnp.float32)
    mask = jnp.where(adj_b > 0, 0.0, NEG_INF).astype(jnp.float32)   # additive mask [B,N,N]
    if b_pad != B:
        xf = jnp.pad(xf, ((0, b_pad - B), (0, 0), (0, 0)))
        mask = jnp.pad(mask, ((0, b_pad - B), (0, 0), (0, 0)))

    kernel = _build_kernel(bt, N, in_ch, hid, out_pad, offs)

    out = pl.pallas_call(
        kernel,
        out_shape=jax.ShapeDtypeStruct((b_pad, out_pad), jnp.float32),
        grid=(b_pad // bt,),
        in_specs=[
            pl.BlockSpec((bt, N, in_ch), lambda g: (g, 0, 0)),
            pl.BlockSpec((bt, N, N), lambda g: (g, 0, 0)),
            pl.BlockSpec((n_rows, width), lambda g: (0, 0)),   # weight slab stays resident
        ],
        out_specs=pl.BlockSpec((bt, out_pad), lambda g: (g, 0)),
        compiler_params=pltpu.CompilerParams(
            dimension_semantics=("parallel",),                 # batch shards across TCs
            vmem_limit_bytes=48 * 1024 * 1024,                 # explicit; headroom vs v7x 64 MiB
        ),
    )(xf, mask, slab)
    return out[:B, :out_ch]


def cpu_arch_gat(x, adj, params):
    """Single-graph forward matching CPUArchGAT.forward -> [out_channels]."""
    return cpu_arch_gat_batch(x[None], adj[None], params)[0]


def _reference(x, adj, params):
    """Pure-JAX reference (same math, per-head loop)."""
    def lrelu(v, s):
        return jnp.where(v > 0, v, s * v)

    def gat(h, wl, bl, wr, br, att, bias):
        C = att.shape[1]
        xl = h @ wl + bl
        xr = h @ wr + br
        acc = jnp.zeros((h.shape[0], C), jnp.float32)
        for hd in range(N_HEADS):
            xlh = xl[:, hd * C:(hd + 1) * C]
            xrh = xr[:, hd * C:(hd + 1) * C]
            s = lrelu(xrh[:, None, :] + xlh[None, :, :], GAT_SLOPE)
            e = jnp.einsum('ijc,c->ij', s, att[hd])
            e = jnp.where(adj > 0, e, NEG_INF)
            a = jax.nn.softmax(e, axis=-1)
            acc = acc + a @ xlh
        return acc / N_HEADS + bias

    h = lrelu(x @ params['w0'] + params['b0'], LRELU_SLOPE)
    h = lrelu(gat(h, params['wl0'], params['bl0'], params['wr0'], params['br0'],
                  params['att0'], params['bias0']), LRELU_SLOPE)
    h = lrelu(gat(h, params['wl1'], params['bl1'], params['wr1'], params['br1'],
                  params['att1'], params['bias1']), LRELU_SLOPE)
    out = h @ params['wout'] + params['bout']
    return out.mean(axis=0)


if __name__ == "__main__":
    key = jax.random.PRNGKey(0)
    N = 8        # nodes in the CPU architecture graph
    IN_CH = 16   # in_channels
    HID = 32     # hidden_channels
    OUT = 32     # out_channels
    H = N_HEADS

    keys = jax.random.split(key, 18)

    def init(k, shape, scale=0.1):
        return (scale * jax.random.normal(k, shape)).astype(jnp.float32)

    params = {
        'w0':    init(keys[0], (IN_CH, HID)),
        'b0':    init(keys[1], (1, HID)),
        'wl0':   init(keys[2], (HID, H * HID)),
        'bl0':   init(keys[3], (1, H * HID)),
        'wr0':   init(keys[4], (HID, H * HID)),
        'br0':   init(keys[5], (1, H * HID)),
        'att0':  init(keys[6], (H, HID)),
        'bias0': init(keys[7], (1, HID)),
        'wl1':   init(keys[8], (HID, H * HID)),
        'bl1':   init(keys[9], (1, H * HID)),
        'wr1':   init(keys[10], (HID, H * HID)),
        'br1':   init(keys[11], (1, H * HID)),
        'att1':  init(keys[12], (H, HID)),
        'bias1': init(keys[13], (1, HID)),
        'wout':  init(keys[14], (HID, OUT)),
        'bout':  init(keys[15], (1, OUT)),
    }

    x = jax.random.normal(keys[16], (N, IN_CH), dtype=jnp.float32)

    # bidirectional ring graph; dense adjacency adj[target, source] + self-loops (PyG default)
    src = jnp.array([i for i in range(N)] + [(i + 1) % N for i in range(N)], jnp.int32)
    dst = jnp.array([(i + 1) % N for i in range(N)] + [i for i in range(N)], jnp.int32)
    adj = jnp.zeros((N, N), jnp.float32)
    adj = adj.at[dst, src].set(1.0)
    adj = adj.at[jnp.arange(N), jnp.arange(N)].set(1.0)

    # single-graph forward (matches the PyTorch module's semantics)
    emb = cpu_arch_gat(x, adj, params)
    jax.block_until_ready(emb)
    assert emb.shape == (OUT,)
    assert bool(jnp.all(jnp.isfinite(emb)))

    ref = _reference(x, adj, params)
    err = float(jnp.max(jnp.abs(emb - ref)))
    # tolerance relaxed slightly vs exact-divide softmax because of pl.reciprocal(approx=True)
    assert err < 2e-3, f"kernel/reference mismatch: {err}"

    # small batch: two graphs in a single (Bt=2) block
    x_b = jnp.stack([x, 0.5 * x])
    adj_b = jnp.stack([adj, adj])
    emb_b = cpu_arch_gat_batch(x_b, adj_b, params)
    jax.block_until_ready(emb_b)
    assert emb_b.shape == (2, OUT)
    assert bool(jnp.allclose(emb_b[0], emb, atol=1e-4))

    # larger batch: 16 graphs, Bt=8 -> grid of 2 parallel steps (exercises batch tiling /
    # megacore sharding / resident weight slab across steps)
    scales = 1.0 + 0.05 * jnp.arange(16, dtype=jnp.float32)     # scales[0] == 1.0
    x_b16 = scales[:, None, None] * x[None]
    adj_b16 = jnp.broadcast_to(adj[None], (16, N, N))
    emb_b16 = cpu_arch_gat_batch(x_b16, adj_b16, params, block_graphs=8)
    jax.block_until_ready(emb_b16)
    assert emb_b16.shape == (16, OUT)
    assert bool(jnp.all(jnp.isfinite(emb_b16)))
    assert bool(jnp.allclose(emb_b16[0], emb, atol=1e-4))

    print("KERNEL_OK")
</pallas_src>

<mosaic_0001>
module attributes {stable_mosaic.version = 11 : i64} {
  func.func @kernel(%arg0: i32, %arg1: memref<1x8x16xf32, #tpu.memory_space<vmem>>, %arg2: memref<1x8x8xf32, #tpu.memory_space<vmem>>, %arg3: memref<384x256xf32, #tpu.memory_space<vmem>>, %arg4: memref<1x128xf32, #tpu.memory_space<vmem>>) attributes {dimension_semantics = [#tpu.dimension_semantics<parallel>], iteration_bounds = array<i64: 1>, scalar_prefetch = 0 : i64, scratch_operands = 0 : i64, tpu.core_type = #tpu.core_type<tc>, window_params = [{transform_indices = @transform_0, window_bounds = array<i64: 1, 8, 16>}, {transform_indices = @transform_1, window_bounds = array<i64: 1, 8, 8>}, {pipeline_mode = #tpu.pipeline_mode<synchronous>, transform_indices = @transform_2, window_bounds = array<i64: 384, 256>}, {transform_indices = @transform_3, window_bounds = array<i64: 1, 128>}]} {
    %c0 = arith.constant 0 : index
    %c0_0 = arith.constant 0 : index
    %c0_1 = arith.constant 0 : index
    %0 = vector.load %arg1[%c0, %c0_0, %c0_1] : memref<1x8x16xf32, #tpu.memory_space<vmem>>, vector<1x8x16xf32>
    %1 = vector.shape_cast %0 : vector<1x8x16xf32> to vector<8x16xf32>
    %c0_2 = arith.constant 0 : index
    %c0_3 = arith.constant 0 : index
    %c0_4 = arith.constant 0 : index
    %2 = vector.load %arg2[%c0_2, %c0_3, %c0_4] : memref<1x8x8xf32, #tpu.memory_space<vmem>>, vector<1x8x8xf32>
    %3 = vector.shape_cast %2 : vector<1x8x8xf32> to vector<1x8x8x1xf32>
    %4 = vector.shape_cast %3 : vector<1x8x8x1xf32> to vector<1x8x8x1xf32>
    %5 = vector.broadcast %4 : vector<1x8x8x1xf32> to vector<1x8x8x4xf32>
    %c0_5 = arith.constant 0 : index
    %c0_6 = arith.constant 0 : index
    %6 = vector.load %arg3[%c0_5, %c0_6] : memref<384x256xf32, #tpu.memory_space<vmem>>, vector<16x32xf32>
    %c112 = arith.constant 112 : index
    %c0_7 = arith.constant 0 : index
    %7 = vector.load %arg3[%c112, %c0_7] : memref<384x256xf32, #tpu.memory_space<vmem>>, vector<1x32xf32>
    %cst = arith.constant dense<0.000000e+00> : vector<8x32xf32>
    %8 = tpu.matmul %1, %6, %cst {dimension_numbers = #tpu.dot_dimension_numbers<[1], [0], [0], [1], [0, 0, 1, 1], [], []>} : vector<8x16xf32>, vector<16x32xf32>, vector<8x32xf32> -> vector<8x32xf32>
    %9 = vector.broadcast %7 : vector<1x32xf32> to vector<8x32xf32>
    %10 = arith.addf %8, %9 : vector<8x32xf32>
    %cst_8 = arith.constant 0.00999999977 : f32
    %11 = vector.broadcast %cst_8 : f32 to vector<8x32xf32>
    %12 = arith.mulf %10, %11 : vector<8x32xf32>
    %13 = arith.maximumf %10, %12 : vector<8x32xf32>
    %c248 = arith.constant 248 : index
    %c0_9 = arith.constant 0 : index
    %14 = vector.load %arg3[%c248, %c0_9] : memref<384x256xf32, #tpu.memory_space<vmem>>, vector<4x128xf32>
    %c256 = arith.constant 256 : index
    %c0_10 = arith.constant 0 : index
    %15 = vector.load %arg3[%c256, %c0_10] : memref<384x256xf32, #tpu.memory_space<vmem>>, vector<128x32xf32>
    %c16 = arith.constant 16 : index
    %c0_11 = arith.constant 0 : index
    %16 = vector.load %arg3[%c16, %c0_11] : memref<384x256xf32, #tpu.memory_space<vmem>>, vector<32x256xf32>
    %c113 = arith.constant 113 : index
    %c0_12 = arith.constant 0 : index
    %17 = vector.load %arg3[%c113, %c0_12] : memref<384x256xf32, #tpu.memory_space<vmem>>, vector<1x256xf32>
    %c114 = arith.constant 114 : index
    %c0_13 = arith.constant 0 : index
    %18 = vector.load %arg3[%c114, %c0_13] : memref<384x256xf32, #tpu.memory_space<vmem>>, vector<1x32xf32>
    %c120 = arith.constant 120 : index
    %c0_14 = arith.constant 0 : index
    %19 = vector.load %arg3[%c120, %c0_14] : memref<384x256xf32, #tpu.memory_space<vmem>>, vector<128x4xf32>
    %cst_15 = arith.constant dense<0.000000e+00> : vector<8x256xf32>
    %20 = tpu.matmul %13, %16, %cst_15 {dimension_numbers = #tpu.dot_dimension_numbers<[1], [0], [0], [1], [0, 0, 1, 1], [], []>} : vector<8x32xf32>, vector<32x256xf32>, vector<8x256xf32> -> vector<8x256xf32>
    %21 = vector.broadcast %17 : vector<1x256xf32> to vector<8x256xf32>
    %22 = arith.addf %20, %21 : vector<8x256xf32>
    %23 = vector.extract_strided_slice %22 {offsets = [0, 0], sizes = [8, 128], strides = [1, 1]} : vector<8x256xf32> to vector<8x128xf32>
    %24 = vector.shape_cast %23 : vector<8x128xf32> to vector<1x8x128xf32>
    %25 = vector.extract_strided_slice %22 {offsets = [0, 128], sizes = [8, 128], strides = [1, 1]} : vector<8x256xf32> to vector<8x128xf32>
    %26 = vector.shape_cast %25 : vector<8x128xf32> to vector<1x8x128xf32>
    %27 = vector.shape_cast %26 : vector<1x8x128xf32> to vector<1x8x1x128xf32>
    %28 = vector.shape_cast %24 : vector<1x8x128xf32> to vector<1x1x8x128xf32>
    %29 = vector.broadcast %27 : vector<1x8x1x128xf32> to vector<1x8x8x128xf32>
    %30 = vector.broadcast %28 : vector<1x1x8x128xf32> to vector<1x8x8x128xf32>
    %31 = arith.addf %29, %30 : vector<1x8x8x128xf32>
    %cst_16 = arith.constant 2.000000e-01 : f32
    %32 = vector.broadcast %cst_16 : f32 to vector<1x8x8x128xf32>
    %33 = arith.mulf %31, %32 : vector<1x8x8x128xf32>
    %34 = arith.maximumf %31, %33 : vector<1x8x8x128xf32>
    %35 = vector.shape_cast %34 : vector<1x8x8x128xf32> to vector<64x128xf32>
    %cst_17 = arith.constant dense<0.000000e+00> : vector<64x4xf32>
    %36 = tpu.matmul %35, %19, %cst_17 {dimension_numbers = #tpu.dot_dimension_numbers<[1], [0], [0], [1], [0, 0, 1, 1], [], []>} : vector<64x128xf32>, vector<128x4xf32>, vector<64x4xf32> -> vector<64x4xf32>
    %37 = vector.shape_cast %36 : vector<64x4xf32> to vector<1x8x8x4xf32>
    %38 = arith.addf %37, %5 : vector<1x8x8x4xf32>
    %cst_18 = arith.constant dense<0xFF800000> : vector<1x8x4xf32>
    %39 = vector.multi_reduction <maximumf>, %38, %cst_18 [2] : vector<1x8x8x4xf32> to vector<1x8x4xf32>
    %40 = vector.shape_cast %39 : vector<1x8x4xf32> to vector<1x8x1x4xf32>
    %41 = vector.broadcast %40 : vector<1x8x1x4xf32> to vector<1x8x8x4xf32>
    %42 = arith.subf %38, %41 : vector<1x8x8x4xf32>
    %43 = math.exp %42 : vector<1x8x8x4xf32>
    %cst_19 = arith.constant dense<0.000000e+00> : vector<1x8x4xf32>
    %44 = vector.multi_reduction <add>, %43, %cst_19 [2] : vector<1x8x8x4xf32> to vector<1x8x4xf32>
    %45 = vector.shape_cast %44 : vector<1x8x4xf32> to vector<1x8x1x4xf32>
    %46 = tpu.reciprocal %45 {approx = true} : vector<1x8x1x4xf32> -> vector<1x8x1x4xf32>
    %47 = vector.broadcast %46 : vector<1x8x1x4xf32> to vector<1x8x8x4xf32>
    %48 = arith.mulf %43, %47 : vector<1x8x8x4xf32>
    %49 = vector.shape_cast %24 : vector<1x8x128xf32> to vector<1x8x1x128xf32>
    %50 = vector.shape_cast %14 : vector<4x128xf32> to vector<1x1x4x128xf32>
    %51 = vector.broadcast %49 : vector<1x8x1x128xf32> to vector<1x8x4x128xf32>
    %52 = vector.broadcast %50 : vector<1x1x4x128xf32> to vector<1x8x4x128xf32>
    %53 = arith.mulf %51, %52 : vector<1x8x4x128xf32>
    %54 = vector.shape_cast %53 : vector<1x8x4x128xf32> to vector<1x32x128xf32>
    %55 = vector.shape_cast %48 : vector<1x8x8x4xf32> to vector<1x8x32xf32>
    "tpu.trace_start"() <{level = 10 : i32, message = "bim,bmc->bic"}> : () -> ()
    %cst_20 = arith.constant dense<0.000000e+00> : vector<1x8x128xf32>
    %56 = tpu.matmul %55, %54, %cst_20 {dimension_numbers = #tpu.dot_dimension_numbers<[2], [1], [1], [2], [0, 0, 0, 1, 1, 2], [0], [0]>} : vector<1x8x32xf32>, vector<1x32x128xf32>, vector<1x8x128xf32> -> vector<1x8x128xf32>
    "tpu.trace_stop"() : () -> ()
    %57 = vector.shape_cast %56 : vector<1x8x128xf32> to vector<8x128xf32>
    %cst_21 = arith.constant dense<0.000000e+00> : vector<8x32xf32>
    %58 = tpu.matmul %57, %15, %cst_21 {dimension_numbers = #tpu.dot_dimension_numbers<[1], [0], [0], [1], [0, 0, 1, 1], [], []>} : vector<8x128xf32>, vector<128x32xf32>, vector<8x32xf32> -> vector<8x32xf32>
    %59 = vector.broadcast %18 : vector<1x32xf32> to vector<8x32xf32>
    %60 = arith.addf %58, %59 : vector<8x32xf32>
    %cst_22 = arith.constant 0.00999999977 : f32
    %61 = vector.broadcast %cst_22 : f32 to vector<8x32xf32>
    %62 = arith.mulf %60, %61 : vector<8x32xf32>
    %63 = arith.maximumf %60, %62 : vector<8x32xf32>
    %c48 = arith.constant 48 : index
    %c0_23 = arith.constant 0 : index
    %64 = vector.load %arg3[%c48, %c0_23] : memref<384x256xf32, #tpu.memory_space<vmem>>, vector<32x256xf32>
    %c115 = arith.constant 115 : index
    %c0_24 = arith.constant 0 : index
    %65 = vector.load %arg3[%c115, %c0_24] : memref<384x256xf32, #tpu.memory_space<vmem>>, vector<1x256xf32>
    %c116 = arith.constant 116 : index
    %c0_25 = arith.constant 0 : index
    %66 = vector.load %arg3[%c116, %c0_25] : memref<384x256xf32, #tpu.memory_space<vmem>>, vector<1x32xf32>
    %c120_26 = arith.constant 120 : index
    %c128 = arith.constant 128 : index
    %67 = vector.load %arg3[%c120_26, %c128] : memref<384x256xf32, #tpu.memory_space<vmem>>, vector<128x4xf32>
    %cst_27 = arith.constant dense<0.000000e+00> : vector<8x256xf32>
    %68 = tpu.matmul %63, %64, %cst_27 {dimension_numbers = #tpu.dot_dimension_numbers<[1], [0], [0], [1], [0, 0, 1, 1], [], []>} : vector<8x32xf32>, vector<32x256xf32>, vector<8x256xf32> -> vector<8x256xf32>
    %69 = vector.broadcast %65 : vector<1x256xf32> to vector<8x256xf32>
    %70 = arith.addf %68, %69 : vector<8x256xf32>
    %71 = vector.extract_strided_slice %70 {offsets = [0, 0], sizes = [8, 128], strides = [1, 1]} : vector<8x256xf32> to vector<8x128xf32>
    %72 = vector.shape_cast %71 : vector<8x128xf32> to vector<1x8x128xf32>
    %73 = vector.extract_strided_slice %70 {offsets = [0, 128], sizes = [8, 128], strides = [1, 1]} : vector<8x256xf32> to vector<8x128xf32>
    %74 = vector.shape_cast %73 : vector<8x128xf32> to vector<1x8x128xf32>
    %75 = vector.shape_cast %74 : vector<1x8x128xf32> to vector<1x8x1x128xf32>
    %76 = vector.shape_cast %72 : vector<1x8x128xf32> to vector<1x1x8x128xf32>
    %77 = vector.broadcast %75 : vector<1x8x1x128xf32> to vector<1x8x8x128xf32>
    %78 = vector.broadcast %76 : vector<1x1x8x128xf32> to vector<1x8x8x128xf32>
    %79 = arith.addf %77, %78 : vector<1x8x8x128xf32>
    %cst_28 = arith.constant 2.000000e-01 : f32
    %80 = vector.broadcast %cst_28 : f32 to vector<1x8x8x128xf32>
    %81 = arith.mulf %79, %80 : vector<1x8x8x128xf32>
    %82 = arith.maximumf %79, %81 : vector<1x8x8x128xf32>
    %83 = vector.shape_cast %82 : vector<1x8x8x128xf32> to vector<64x128xf32>
    %cst_29 = arith.constant dense<0.000000e+00> : vector<64x4xf32>
    %84 = tpu.matmul %83, %67, %cst_29 {dimension_numbers = #tpu.dot_dimension_numbers<[1], [0], [0], [1], [0, 0, 1, 1], [], []>} : vector<64x128xf32>, vector<128x4xf32>, vector<64x4xf32> -> vector<64x4xf32>
    %85 = vector.shape_cast %84 : vector<64x4xf32> to vector<1x8x8x4xf32>
    %86 = arith.addf %85, %5 : vector<1x8x8x4xf32>
    %cst_30 = arith.constant dense<0xFF800000> : vector<1x8x4xf32>
    %87 = vector.multi_reduction <maximumf>, %86, %cst_30 [2] : vector<1x8x8x4xf32> to vector<1x8x4xf32>
    %88 = vector.shape_cast %87 : vector<1x8x4xf32> to vector<1x8x1x4xf32>
    %89 = vector.broadcast %88 : vector<1x8x1x4xf32> to vector<1x8x8x4xf32>
    %90 = arith.subf %86, %89 : vector<1x8x8x4xf32>
    %91 = math.exp %90 : vector<1x8x8x4xf32>
    %cst_31 = arith.constant dense<0.000000e+00> : vector<1x8x4xf32>
    %92 = vector.multi_reduction <add>, %91, %cst_31 [2] : vector<1x8x8x4xf32> to vector<1x8x4xf32>
    %93 = vector.shape_cast %92 : vector<1x8x4xf32> to vector<1x8x1x4xf32>
    %94 = tpu.reciprocal %93 {approx = true} : vector<1x8x1x4xf32> -> vector<1x8x1x4xf32>
    %95 = vector.broadcast %94 : vector<1x8x1x4xf32> to vector<1x8x8x4xf32>
    %96 = arith.mulf %91, %95 : vector<1x8x8x4xf32>
    %97 = vector.shape_cast %72 : vector<1x8x128xf32> to vector<1x8x1x128xf32>
    %98 = vector.shape_cast %14 : vector<4x128xf32> to vector<1x1x4x128xf32>
    %99 = vector.broadcast %97 : vector<1x8x1x128xf32> to vector<1x8x4x128xf32>
    %100 = vector.broadcast %98 : vector<1x1x4x128xf32> to vector<1x8x4x128xf32>
    %101 = arith.mulf %99, %100 : vector<1x8x4x128xf32>
    %102 = vector.shape_cast %101 : vector<1x8x4x128xf32> to vector<1x32x128xf32>
    %103 = vector.shape_cast %96 : vector<1x8x8x4xf32> to vector<1x8x32xf32>
    "tpu.trace_start"() <{level = 10 : i32, message = "bim,bmc->bic"}> : () -> ()
    %cst_32 = arith.constant dense<0.000000e+00> : vector<1x8x128xf32>
    %104 = tpu.matmul %103, %102, %cst_32 {dimension_numbers = #tpu.dot_dimension_numbers<[2], [1], [1], [2], [0, 0, 0, 1, 1, 2], [0], [0]>} : vector<1x8x32xf32>, vector<1x32x128xf32>, vector<1x8x128xf32> -> vector<1x8x128xf32>
    "tpu.trace_stop"() : () -> ()
    %105 = vector.shape_cast %104 : vector<1x8x128xf32> to vector<8x128xf32>
    %cst_33 = arith.constant dense<0.000000e+00> : vector<8x32xf32>
    %106 = tpu.matmul %105, %15, %cst_33 {dimension_numbers = #tpu.dot_dimension_numbers<[1], [0], [0], [1], [0, 0, 1, 1], [], []>} : vector<8x128xf32>, vector<128x32xf32>, vector<8x32xf32> -> vector<8x32xf32>
    %107 = vector.broadcast %66 : vector<1x32xf32> to vector<8x32xf32>
    %108 = arith.addf %106, %107 : vector<8x32xf32>
    %cst_34 = arith.constant 0.00999999977 : f32
    %109 = vector.broadcast %cst_34 : f32 to vector<8x32xf32>
    %110 = arith.mulf %108, %109 : vector<8x32xf32>
    %111 = arith.maximumf %108, %110 : vector<8x32xf32>
    %c80 = arith.constant 80 : index
    %c0_35 = arith.constant 0 : index
    %112 = vector.load %arg3[%c80, %c0_35] : memref<384x256xf32, #tpu.memory_space<vmem>>, vector<32x128xf32>
    %c117 = arith.constant 117 : index
    %c0_36 = arith.constant 0 : index
    %113 = vector.load %arg3[%c117, %c0_36] : memref<384x256xf32, #tpu.memory_space<vmem>>, vector<1x128xf32>
    %cst_37 = arith.constant dense<0.000000e+00> : vector<8x128xf32>
    %114 = tpu.matmul %111, %112, %cst_37 {dimension_numbers = #tpu.dot_dimension_numbers<[1], [0], [0], [1], [0, 0, 1, 1], [], []>} : vector<8x32xf32>, vector<32x128xf32>, vector<8x128xf32> -> vector<8x128xf32>
    %115 = vector.broadcast %113 : vector<1x128xf32> to vector<8x128xf32>
    %116 = arith.addf %114, %115 : vector<8x128xf32>
    %117 = vector.shape_cast %116 : vector<8x128xf32> to vector<1x8x128xf32>
    %cst_38 = arith.constant dense<0.000000e+00> : vector<1x128xf32>
    %118 = vector.multi_reduction <add>, %117, %cst_38 [1] : vector<1x8x128xf32> to vector<1x128xf32>
    %cst_39 = arith.constant 8.000000e+00 : f32
    %119 = vector.broadcast %cst_39 : f32 to vector<1x128xf32>
    %120 = arith.divf %118, %119 : vector<1x128xf32>
    %c0_40 = arith.constant 0 : index
    %c0_41 = arith.constant 0 : index
    %121 = vector.load %arg4[%c0_40, %c0_41] : memref<1x128xf32, #tpu.memory_space<vmem>>, vector<1x128xf32>
    tpu.vector_store %arg4[%c0_40, %c0_41], %120 {strides = array<i32>} : memref<1x128xf32, #tpu.memory_space<vmem>>, vector<1x128xf32>,
    return
  }
  func.func @transform_0(%arg0: i32) -> (i32, i32, i32) {
    %c0_i32 = arith.constant 0 : i32
    %c0_i32_0 = arith.constant 0 : i32
    %c0_i32_1 = arith.constant 0 : i32
    return %arg0, %c0_i32, %c0_i32_0 : i32, i32, i32
  }
  func.func @transform_1(%arg0: i32) -> (i32, i32, i32) {
    %c0_i32 = arith.constant 0 : i32
    %c0_i32_0 = arith.constant 0 : i32
    %c0_i32_1 = arith.constant 0 : i32
    return %arg0, %c0_i32, %c0_i32_0 : i32, i32, i32
  }
  func.func @transform_2(%arg0: i32) -> (i32, i32) {
    %c0_i32 = arith.constant 0 : i32
    %c0_i32_0 = arith.constant 0 : i32
    %c0_i32_1 = arith.constant 0 : i32
    return %c0_i32, %c0_i32_0 : i32, i32
  }
  func.func @transform_3(%arg0: i32) -> (i32, i32) {
    %c0_i32 = arith.constant 0 : i32
    %c0_i32_0 = arith.constant 0 : i32
    return %arg0, %c0_i32 : i32, i32
  }
}

</mosaic_0001>

<llo_original>
// kernel: tpu_custom_call.1
$region0: #{tpu_custom_call.1}
  #allocation0 [shape = 'u32[]', space=smem, size = 0x4, offset = 0x4, fixed_abs, tag = 'smem constant byte address 0x4 - core index']
  #allocation1 [shape = 'u32[144,128]{1,0:T(1,128)}', space=vmem, size = 0x12000, scoped, tag = 'internal scratch']
  %s0 = inlined_call_operand.hbm [shape: f32[1,8,16], index: 0, kind: input, shape index: {}]
  %s1 = inlined_call_operand.hbm [shape: f32[1,8,8], index: 1, kind: input, shape index: {}]
  %s2 = inlined_call_operand.hbm [shape: f32[384,256], index: 2, kind: input, shape index: {}]
  %s3 = inlined_call_operand.hbm [shape: f32[1,128], index: 3, kind: output, shape index: {}]
  %s4 = sld [smem:[#allocation0]]
  $region34: #{tpu_custom_call.1} parent=0
    _
  %s6 = ssub.s32 1, %s4
  %s7 = scalar_select 0, %s6, %s4
  $region1: #{tpu_custom_call.1} parent=0
    #allocation2 [shape = 'u8[4096]{0}', space=vmem, size = 0x1000, scoped, tag = 'input window, operand 0, single buffered']
    #allocation3 [shape = 's32[1]{0}', space=sflag, size = 0x4, scoped, tag = 'scoped memory for tpu_custom_call.1']
    #allocation4 [shape = 's32[1]{0}', space=sflag, size = 0x4, scoped, tag = 'scoped memory for tpu_custom_call.1']
    #allocation5 [shape = 'u8[4096]{0}', space=vmem, size = 0x1000, scoped, tag = 'input window, operand 1, single buffered']
    #allocation6 [shape = 's32[1]{0}', space=sflag, size = 0x4, scoped, tag = 'scoped memory for tpu_custom_call.1']
    #allocation7 [shape = 'u8[393216]{0}', space=vmem, size = 0x60000, scoped, tag = 'input window, operand 2, single buffered']
    #allocation8 [shape = 'u8[512]{0}', space=vmem, size = 0x400, scoped, tag = 'output window, operand 0, single buffered']
    %8 = vsyncpa [#allocation3], 0
    %9 = vsyncpa [#allocation6], 0
    %10 = vsyncpa [#allocation4], 0
    // Predicated region
    $region2: #{tpu_custom_call.1} parent=1 // pred_check
      _
    $region3: #{tpu_custom_call.1} parent=1 // pred_check_branch
      %12 = sbr.rel (0) target = $region5
    $region4: #{tpu_custom_call.1} parent=1 // pred_region
      %s14 = ssub.s32 128, 128
      %15 = vsyncadd [#allocation3], %s14
      %s17 = sshll.u32 [#allocation2], 4
      %s18 = int_to_ptr.vmem [resolvable:$true] %s17
      %20 = dma.hbm_to_vmem [thread:$0]  %s0, 128, %s18, [#allocation3]
    $region5: #{tpu_custom_call.1} parent=1 // pred_fallthru
      _
    // Predicated region
    $region6: #{tpu_custom_call.1} parent=1 // pred_check
      _
    $region7: #{tpu_custom_call.1} parent=1 // pred_check_branch
      %22 = sbr.rel (0) target = $region9
    $region8: #{tpu_custom_call.1} parent=1 // pred_region
      %s24 = ssub.s32 128, 128
      %25 = vsyncadd [#allocation6], %s24
      %s27 = sshll.u32 [#allocation5], 4
      %s28 = int_to_ptr.vmem [resolvable:$true] %s27
      %30 = dma.hbm_to_vmem [thread:$0]  %s1, 128, %s28, [#allocation6]
    $region9: #{tpu_custom_call.1} parent=1 // pred_fallthru
      _
    // Predicated region
    $region10: #{tpu_custom_call.1} parent=1 // pred_check
      _
    $region11: #{tpu_custom_call.1} parent=1 // pred_check_branch
      %32 = sbr.rel (0) target = $region13
    $region12: #{tpu_custom_call.1} parent=1 // pred_region
      %s34 = ssub.s32 12288, 12288
      %35 = vsyncadd [#allocation6], %s34
      %s36 = sshll.u32 [#allocation7], 4
      %s37 = int_to_ptr.vmem [resolvable:$true] %s36
      %42 = dma.hbm_to_vmem [thread:$0]  %s2, 12288, %s37, [#allocation6], 256, 256, 16
    $region13: #{tpu_custom_call.1} parent=1 // pred_fallthru
      _
    // Predicated region
    $region14: #{tpu_custom_call.1} parent=1 // pred_check
      _
    $region15: #{tpu_custom_call.1} parent=1 // pred_check_branch
      %44 = sbr.rel (0) target = $region17
    $region16: #{tpu_custom_call.1} parent=1 // pred_region
      %45 = dma.done [#allocation3], 128
    $region17: #{tpu_custom_call.1} parent=1 // pred_fallthru
      _
    // Predicated region
    $region18: #{tpu_custom_call.1} parent=1 // pred_check
      _
    $region19: #{tpu_custom_call.1} parent=1 // pred_check_branch
      %47 = sbr.rel (0) target = $region21
    $region20: #{tpu_custom_call.1} parent=1 // pred_region
      %48 = dma.done [#allocation6], 128
    $region21: #{tpu_custom_call.1} parent=1 // pred_fallthru
      _
    // Predicated region
    $region22: #{tpu_custom_call.1} parent=1 // pred_check
      _
    $region23: #{tpu_custom_call.1} parent=1 // pred_check_branch
      %50 = sbr.rel (0) target = $region25
    $region24: #{tpu_custom_call.1} parent=1 // pred_region
      %51 = dma.done [#allocation6], 12288
    $region25: #{tpu_custom_call.1} parent=1 // pred_fallthru
      _
    %v52 = vld [vmem:[#allocation2] sm:$0xff]
    %v53 = vld [vmem:[#allocation5] sm:$0xff]
    %v54 = vlaneseq
    %v55 = vshrl.u32 %v54, 7
    %v56 = vsub.s32 0, %v55
    %v57 = vrot.slane %v53, %v56
    %59 = vbcast.lane.b32.xlu0 %v57, 256
    %v60 = vpop.permute.xlu0 %59
    %v61 = vlaneseq
    %v62 = vshrl.u32 %v61, 7
    %v63 = vsub.s32 1, %v62
    %v64 = vrot.slane %v53, %v63
    %66 = vbcast.lane.b32.xlu0 %v64, 256
    %v67 = vpop.permute.xlu0 %66
    %v68 = vlaneseq
    %v69 = vshrl.u32 %v68, 7
    %v70 = vsub.s32 2, %v69
    %v71 = vrot.slane %v53, %v70
    %73 = vbcast.lane.b32.xlu0 %v71, 256
    %v74 = vpop.permute.xlu0 %73
    %v75 = vlaneseq
    %v76 = vshrl.u32 %v75, 7
    %v77 = vsub.s32 3, %v76
    %v78 = vrot.slane %v53, %v77
    %80 = vbcast.lane.b32.xlu0 %v78, 256
    %v81 = vpop.permute.xlu0 %80
    %v82 = vlaneseq
    %v83 = vshrl.u32 %v82, 7
    %v84 = vsub.s32 4, %v83
    %v85 = vrot.slane %v53, %v84
    %87 = vbcast.lane.b32.xlu0 %v85, 256
    %v88 = vpop.permute.xlu0 %87
    %v89 = vlaneseq
    %v90 = vshrl.u32 %v89, 7
    %v91 = vsub.s32 5, %v90
    %v92 = vrot.slane %v53, %v91
    %94 = vbcast.lane.b32.xlu0 %v92, 256
    %v95 = vpop.permute.xlu0 %94
    %v96 = vlaneseq
    %v97 = vshrl.u32 %v96, 7
    %v98 = vsub.s32 6, %v97
    %v99 = vrot.slane %v53, %v98
    %101 = vbcast.lane.b32.xlu0 %v99, 256
    %v102 = vpop.permute.xlu0 %101
    %v103 = vlaneseq
    %v104 = vshrl.u32 %v103, 7
    %v105 = vsub.s32 7, %v104
    %v106 = vrot.slane %v53, %v105
    %108 = vbcast.lane.b32.xlu0 %v106, 256
    %v109 = vpop.permute.xlu0 %108
    %v110 = vld [vmem:[#allocation7] sm:$0xff]
    %v111 = vld [vmem:[#allocation7 + $0x10] sm:$0xff]
    %v112 = vld [vmem:[#allocation7 + $0xe0] ss:$0 sm:$0xff]
    %vm113 = vcmask 130048
    %v115 = vsel %vm113, %v52, 0
    %117 = vmatprep.subr.mxu0 0.0
    %118 = vmatpush1.msra.mxu0 %v110
    %119 = vmatprep.subr.mxu0 0.0
    %120 = vmatpush1.msra.mxu0 %v111
    %121 = vmatprep.subr.mxu0 0.0
    %122 = vmatpush1.msra.mxu0 0.0
    %123 = vmatprep.subr.mxu0 0.0
    %124 = vmatpush1.msra.mxu0 0.0
    %125 = vmatprep.subr.mxu0 0.0
    %126 = vmatpush1.msra.mxu0 0.0
    %127 = vmatprep.subr.mxu0 0.0
    %128 = vmatpush1.msra.mxu0 0.0
    %129 = vmatprep.subr.mxu0 0.0
    %130 = vmatpush1.msra.mxu0 0.0
    %131 = vmatprep.subr.mxu0 0.0
    %132 = vmatpush1.msra.mxu0 0.0
    %133 = vmatprep.subr.mxu0 0.0
    %134 = vmatpush1.msra.mxu0 0.0
    %135 = vmatprep.subr.mxu0 0.0
    %136 = vmatpush1.msra.mxu0 0.0
    %137 = vmatprep.subr.mxu0 0.0
    %138 = vmatpush1.msra.mxu0 0.0
    %139 = vmatprep.subr.mxu0 0.0
    %140 = vmatpush1.msra.mxu0 0.0
    %141 = vmatprep.subr.mxu0 0.0
    %142 = vmatpush1.msra.mxu0 0.0
    %143 = vmatprep.subr.mxu0 0.0
    %144 = vmatpush1.msra.mxu0 0.0
    %145 = vmatprep.subr.mxu0 0.0
    %146 = vmatpush1.msra.mxu0 0.0
    %147 = vmatprep.subr.mxu0 0.0
    %148 = vmatpush1.msra.mxu0 0.0
    %149 = vmatprep.subr.mxu0 0.0
    %150 = vmatpush1.msra.mxu0 0.0
    %151 = vmatprep.subr.mxu0 0.0
    %152 = vmatpush1.msra.mxu0 0.0
    %153 = vmatprep.subr.mxu0 0.0
    %154 = vmatpush1.msra.mxu0 0.0
    %155 = vmatprep.subr.mxu0 0.0
    %156 = vmatpush1.msra.mxu0 0.0
    %157 = vmatprep.subr.mxu0 0.0
    %158 = vmatpush1.msra.mxu0 0.0
    %159 = vmatprep.subr.mxu0 0.0
    %160 = vmatpush1.msra.mxu0 0.0
    %161 = vmatprep.subr.mxu0 0.0
    %162 = vmatpush1.msra.mxu0 0.0
    %163 = vmatprep.subr.mxu0 0.0
    %164 = vmatpush1.msra.mxu0 0.0
    %165 = vmatprep.subr.mxu0 0.0
    %166 = vmatpush1.msra.mxu0 0.0
    %167 = vmatprep.subr.mxu0 0.0
    %168 = vmatpush1.msra.mxu0 0.0
    %169 = vmatprep.subr.mxu0 0.0
    %170 = vmatpush1.msra.mxu0 0.0
    %171 = vmatprep.subr.mxu0 0.0
    %172 = vmatpush1.msra.mxu0 0.0
    %173 = vmatprep.subr.mxu0 0.0
    %174 = vmatpush1.msra.mxu0 0.0
    %175 = vmatprep.subr.mxu0 0.0
    %176 = vmatpush1.msra.mxu0 0.0
    %177 = vmatprep.subr.mxu0 0.0
    %178 = vmatpush1.msra.mxu0 0.0
    %179 = vmatprep.subr.mxu0 0.0
    %180 = vmatpush1.msra.mxu0 0.0
    %181 = vmatprep.mubr.f32.mxu0 0.0
    %182 = vmatmul.mubr.f32.gmra.mrb[0].mxu0 %v115
    %v183 = vpop.f32.mrb[0].mxu0
    %v184 = vadd.f32 %v112, %v183
    %v185 = vpop.f32.mrb[0].mxu0
    %186 = vdwg.mxu0
    %v187 = vmul.f32 %v184, 0.01
    %v188 = vmax.f32 %v184, %v187
    %v189 = vld [vmem:[#allocation7 + $0x1f0] sm:$0xf]
    %v190 = vld [vmem:[#allocation7 + $0x200] sm:$0xff]
    %v191 = vld [vmem:[#allocation7 + $0x210] sm:$0xff]
    %v192 = vld [vmem:[#allocation7 + $0x220] sm:$0xff]
    %v193 = vld [vmem:[#allocation7 + $0x230] sm:$0xff]
    %v194 = vld [vmem:[#allocation7 + $0x240] sm:$0xff]
    %v195 = vld [vmem:[#allocation7 + $0x250] sm:$0xff]
    %v196 = vld [vmem:[#allocation7 + $0x260] sm:$0xff]
    %v197 = vld [vmem:[#allocation7 + $0x270] sm:$0xff]
    %v198 = vld [vmem:[#allocation7 + $0x280] sm:$0xff]
    %v199 = vld [vmem:[#allocation7 + $0x290] sm:$0xff]
    %v200 = vld [vmem:[#allocation7 + $0x2a0] sm:$0xff]
    %v201 = vld [vmem:[#allocation7 + $0x2b0] sm:$0xff]
    %v202 = vld [vmem:[#allocation7 + $0x2c0] sm:$0xff]
    %v203 = vld [vmem:[#allocation7 + $0x2d0] sm:$0xff]
    %v204 = vld [vmem:[#allocation7 + $0x2e0] sm:$0xff]
    %v205 = vld [vmem:[#allocation7 + $0x2f0] sm:$0xff]
    %v206 = vld [vmem:[#allocation7 + $0x20] sm:$0xff]
    %v207 = vld [vmem:[#allocation7 + $0x28] sm:$0xff]
    %v208 = vld [vmem:[#allocation7 + $0x30] sm:$0xff]
    %v209 = vld [vmem:[#allocation7 + $0x38] sm:$0xff]
    %v210 = vld [vmem:[#allocation7 + $0x40] sm:$0xff]
    %v211 = vld [vmem:[#allocation7 + $0x48] sm:$0xff]
    %v212 = vld [vmem:[#allocation7 + $0x50] sm:$0xff]
    %v213 = vld [vmem:[#allocation7 + $0x58] sm:$0xff]
    %s214 = scalar_lea.vmem [#allocation7], 225
    %v215 = vld [vmem:[%s214] ss:$8 sm:$0x3]
    %v216 = vld [vmem:[#allocation7 + $0xe2] ss:$0 sm:$0xff]
    %v217 = vld [vmem:[#allocation7 + $0xf0] sm:$0xff]
    %v218 = vld [vmem:[#allocation7 + $0x100] sm:$0xff]
    %v219 = vld [vmem:[#allocation7 + $0x110] sm:$0xff]
    %v220 = vld [vmem:[#allocation7 + $0x120] sm:$0xff]
    %v221 = vld [vmem:[#allocation7 + $0x130] sm:$0xff]
    %v222 = vld [vmem:[#allocation7 + $0x140] sm:$0xff]
    %v223 = vld [vmem:[#allocation7 + $0x150] sm:$0xff]
    %v224 = vld [vmem:[#allocation7 + $0x160] sm:$0xff]
    %v225 = vld [vmem:[#allocation7 + $0x170] sm:$0xff]
    %v226 = vld [vmem:[#allocation7 + $0x180] sm:$0xff]
    %v227 = vld [vmem:[#allocation7 + $0x190] sm:$0xff]
    %v228 = vld [vmem:[#allocation7 + $0x1a0] sm:$0xff]
    %v229 = vld [vmem:[#allocation7 + $0x1b0] sm:$0xff]
    %v230 = vld [vmem:[#allocation7 + $0x1c0] sm:$0xff]
    %v231 = vld [vmem:[#allocation7 + $0x1d0] sm:$0xff]
    %v232 = vld [vmem:[#allocation7 + $0x1e0] sm:$0xff]
    %v234 = vlaneseq
    %v235 = vshrl.u32 %v234, 7
    %v236 = vsub.s32 0, %v235
    %v237 = vrot.slane %v215, %v236
    %v238 = vlaneseq
    %v239 = vshrl.u32 %v238, 7
    %v240 = vsub.s32 1, %v239
    %v241 = vrot.slane %v215, %v240
    %vm244 = vcmask 261120
    %v246 = vsel %vm244, %v188, 0
    %248 = vmatprep.subr.mxu0 %v207
    %249 = vmatpush1.msra.mxu0 %v206
    %250 = vmatprep.subr.mxu0 %v209
    %251 = vmatpush1.msra.mxu0 %v208
    %252 = vmatprep.subr.mxu0 %v211
    %253 = vmatpush1.msra.mxu0 %v210
    %254 = vmatprep.subr.mxu0 %v213
    %255 = vmatpush1.msra.mxu0 %v212
    %256 = vmatprep.subr.mxu0 0.0
    %257 = vmatpush1.msra.mxu0 0.0
    %258 = vmatprep.subr.mxu0 0.0
    %259 = vmatpush1.msra.mxu0 0.0
    %260 = vmatprep.subr.mxu0 0.0
    %261 = vmatpush1.msra.mxu0 0.0
    %262 = vmatprep.subr.mxu0 0.0
    %263 = vmatpush1.msra.mxu0 0.0
    %264 = vmatprep.subr.mxu0 0.0
    %265 = vmatpush1.msra.mxu0 0.0
    %266 = vmatprep.subr.mxu0 0.0
    %267 = vmatpush1.msra.mxu0 0.0
    %268 = vmatprep.subr.mxu0 0.0
    %269 = vmatpush1.msra.mxu0 0.0
    %270 = vmatprep.subr.mxu0 0.0
    %271 = vmatpush1.msra.mxu0 0.0
    %272 = vmatprep.subr.mxu0 0.0
    %273 = vmatpush1.msra.mxu0 0.0
    %274 = vmatprep.subr.mxu0 0.0
    %275 = vmatpush1.msra.mxu0 0.0
    %276 = vmatprep.subr.mxu0 0.0
    %277 = vmatpush1.msra.mxu0 0.0
    %278 = vmatprep.subr.mxu0 0.0
    %279 = vmatpush1.msra.mxu0 0.0
    %280 = vmatprep.subr.mxu0 0.0
    %281 = vmatpush1.msra.mxu0 0.0
    %282 = vmatprep.subr.mxu0 0.0
    %283 = vmatpush1.msra.mxu0 0.0
    %284 = vmatprep.subr.mxu0 0.0
    %285 = vmatpush1.msra.mxu0 0.0
    %286 = vmatprep.subr.mxu0 0.0
    %287 = vmatpush1.msra.mxu0 0.0
    %288 = vmatprep.subr.mxu0 0.0
    %289 = vmatpush1.msra.mxu0 0.0
    %290 = vmatprep.subr.mxu0 0.0
    %291 = vmatpush1.msra.mxu0 0.0
    %292 = vmatprep.subr.mxu0 0.0
    %293 = vmatpush1.msra.mxu0 0.0
    %294 = vmatprep.subr.mxu0 0.0
    %295 = vmatpush1.msra.mxu0 0.0
    %296 = vmatprep.subr.mxu0 0.0
    %297 = vmatpush1.msra.mxu0 0.0
    %298 = vmatprep.subr.mxu0 0.0
    %299 = vmatpush1.msra.mxu0 0.0
    %300 = vmatprep.subr.mxu0 0.0
    %301 = vmatpush1.msra.mxu0 0.0
    %302 = vmatprep.subr.mxu0 0.0
    %303 = vmatpush1.msra.mxu0 0.0
    %304 = vmatprep.subr.mxu0 0.0
    %305 = vmatpush1.msra.mxu0 0.0
    %306 = vmatprep.subr.mxu0 0.0
    %307 = vmatpush1.msra.mxu0 0.0
    %308 = vmatprep.subr.mxu0 0.0
    %309 = vmatpush1.msra.mxu0 0.0
    %310 = vmatprep.subr.mxu0 0.0
    %311 = vmatpush1.msra.mxu0 0.0
    %312 = vmatprep.mubr.f32.mxu0 0.0
    %313 = vmatmul.mubr.f32.gmra.mrb[0].mxu0 %v246
    %v314 = vpop.f32.mrb[0].mxu0
    %v315 = vadd.f32 %v237, %v314
    %v316 = vpop.f32.mrb[0].mxu0
    %v317 = vadd.f32 %v241, %v316
    %318 = vdwg.mxu0
    %v320 = vcombine.high %v317, %v317
    %v322 = vunpack.c.l.s4 1966171168
    %v323 = vunpack.c.0.s8 %v322
    %v324 = vlaneseq
    %v325 = vshrl.u32 %v324, 7
    %v326 = vsub.s32 %v323, %v325
    %v327 = vrot.slane %v317, %v326
    %v329 = vunpack.c.l.s4 1966171168
    %v330 = vunpack.c.0.s8 %v329
    %v331 = vlaneseq
    %v332 = vshrl.u32 %v331, 7
    %v333 = vsub.s32 %v330, %v332
    %v334 = vrot.slane %v320, %v333
    %v335 = vcombine.high %v327, %v327
    %v336 = vcombine.high %v334, %v334
    %v338 = vunpack.c.l.s4 1966171168
    %v339 = vunpack.c.0.s8 %v338
    %v340 = vlaneseq
    %v341 = vshrl.u32 %v340, 7
    %v342 = vsub.s32 %v339, %v341
    %v343 = vrot.slane %v327, %v342
    %v345 = vunpack.c.l.s4 1966171168
    %v346 = vunpack.c.0.s8 %v345
    %v347 = vlaneseq
    %v348 = vshrl.u32 %v347, 7
    %v349 = vsub.s32 %v346, %v348
    %v350 = vrot.slane %v334, %v349
    %v352 = vunpack.c.l.s4 1966171168
    %v353 = vunpack.c.0.s8 %v352
    %v354 = vlaneseq
    %v355 = vshrl.u32 %v354, 7
    %v356 = vsub.s32 %v353, %v355
    %v357 = vrot.slane %v335, %v356
    %v359 = vunpack.c.l.s4 1966171168
    %v360 = vunpack.c.0.s8 %v359
    %v361 = vlaneseq
    %v362 = vshrl.u32 %v361, 7
    %v363 = vsub.s32 %v360, %v362
    %v364 = vrot.slane %v336, %v363
    %v365 = vcombine.high %v343, %v343
    %v366 = vcombine.high %v350, %v350
    %v367 = vcombine.high %v357, %v357
    %v368 = vcombine.high %v364, %v364
    %v369 = vlaneseq
    %v370 = vshrl.u32 %v369, 7
    %v371 = vsub.s32 0, %v370
    %v372 = vrot.slane %v343, %v371
    %v373 = vlaneseq
    %v374 = vshrl.u32 %v373, 7
    %v375 = vsub.s32 0, %v374
    %v376 = vrot.slane %v357, %v375
    %v377 = vlaneseq
    %v378 = vshrl.u32 %v377, 7
    %v379 = vsub.s32 0, %v378
    %v380 = vrot.slane %v365, %v379
    %v381 = vlaneseq
    %v382 = vshrl.u32 %v381, 7
    %v383 = vsub.s32 0, %v382
    %v384 = vrot.slane %v367, %v383
    %v385 = vlaneseq
    %v386 = vshrl.u32 %v385, 7
    %v387 = vsub.s32 0, %v386
    %v388 = vrot.slane %v350, %v387
    %v389 = vlaneseq
    %v390 = vshrl.u32 %v389, 7
    %v391 = vsub.s32 0, %v390
    %v392 = vrot.slane %v364, %v391
    %v393 = vlaneseq
    %v394 = vshrl.u32 %v393, 7
    %v395 = vsub.s32 0, %v394
    %v396 = vrot.slane %v366, %v395
    %v397 = vlaneseq
    %v398 = vshrl.u32 %v397, 7
    %v399 = vsub.s32 0, %v398
    %v400 = vrot.slane %v368, %v399
    %v409 = vadd.f32 %v372, %v315
    %v410 = vadd.f32 %v376, %v315
    %v411 = vadd.f32 %v380, %v315
    %v412 = vadd.f32 %v384, %v315
    %v413 = vadd.f32 %v388, %v315
    %v414 = vadd.f32 %v392, %v315
    %v415 = vadd.f32 %v396, %v315
    %v416 = vadd.f32 %v400, %v315
    %v417 = vmul.f32 %v409, 0.2
    %v418 = vmul.f32 %v410, 0.2
    %v419 = vmul.f32 %v411, 0.2
    %v420 = vmul.f32 %v412, 0.2
    %v421 = vmul.f32 %v413, 0.2
    %v422 = vmul.f32 %v414, 0.2
    %v423 = vmul.f32 %v415, 0.2
    %v424 = vmul.f32 %v416, 0.2
    %v425 = vmax.f32 %v409, %v417
    %v426 = vmax.f32 %v410, %v418
    %v427 = vmax.f32 %v411, %v419
    %v428 = vmax.f32 %v412, %v420
    %v429 = vmax.f32 %v413, %v421
    %v430 = vmax.f32 %v414, %v422
    %v431 = vmax.f32 %v415, %v423
    %v432 = vmax.f32 %v416, %v424
    %433 = vmatprep.subr.mxu0 0.0
    %434 = vmatpush1.msra.mxu0 %v217
    %435 = vmatprep.subr.mxu0 0.0
    %436 = vmatpush1.msra.mxu0 %v218
    %437 = vmatprep.subr.mxu0 0.0
    %438 = vmatpush1.msra.mxu0 %v219
    %439 = vmatprep.subr.mxu0 0.0
    %440 = vmatpush1.msra.mxu0 %v220
    %441 = vmatprep.subr.mxu0 0.0
    %442 = vmatpush1.msra.mxu0 %v221
    %443 = vmatprep.subr.mxu0 0.0
    %444 = vmatpush1.msra.mxu0 %v222
    %445 = vmatprep.subr.mxu0 0.0
    %446 = vmatpush1.msra.mxu0 %v223
    %447 = vmatprep.subr.mxu0 0.0
    %448 = vmatpush1.msra.mxu0 %v224
    %449 = vmatprep.subr.mxu0 0.0
    %450 = vmatpush1.msra.mxu0 %v225
    %451 = vmatprep.subr.mxu0 0.0
    %452 = vmatpush1.msra.mxu0 %v226
    %453 = vmatprep.subr.mxu0 0.0
    %454 = vmatpush1.msra.mxu0 %v227
    %455 = vmatprep.subr.mxu0 0.0
    %456 = vmatpush1.msra.mxu0 %v228
    %457 = vmatprep.subr.mxu0 0.0
    %458 = vmatpush1.msra.mxu0 %v229
    %459 = vmatprep.subr.mxu0 0.0
    %460 = vmatpush1.msra.mxu0 %v230
    %461 = vmatprep.subr.mxu0 0.0
    %462 = vmatpush1.msra.mxu0 %v231
    %463 = vmatprep.subr.mxu0 0.0
    %464 = vmatpush1.msra.mxu0 %v232
    %465 = vmatprep.subr.mxu0 0.0
    %466 = vmatpush1.msra.mxu0 0.0
    %467 = vmatprep.subr.mxu0 0.0
    %468 = vmatpush1.msra.mxu0 0.0
    %469 = vmatprep.subr.mxu0 0.0
    %470 = vmatpush1.msra.mxu0 0.0
    %471 = vmatprep.subr.mxu0 0.0
    %472 = vmatpush1.msra.mxu0 0.0
    %473 = vmatprep.subr.mxu0 0.0
    %474 = vmatpush1.msra.mxu0 0.0
    %475 = vmatprep.subr.mxu0 0.0
    %476 = vmatpush1.msra.mxu0 0.0
    %477 = vmatprep.subr.mxu0 0.0
    %478 = vmatpush1.msra.mxu0 0.0
    %479 = vmatprep.subr.mxu0 0.0
    %480 = vmatpush1.msra.mxu0 0.0
    %481 = vmatprep.subr.mxu0 0.0
    %482 = vmatpush1.msra.mxu0 0.0
    %483 = vmatprep.subr.mxu0 0.0
    %484 = vmatpush1.msra.mxu0 0.0
    %485 = vmatprep.subr.mxu0 0.0
    %486 = vmatpush1.msra.mxu0 0.0
    %487 = vmatprep.subr.mxu0 0.0
    %488 = vmatpush1.msra.mxu0 0.0
    %489 = vmatprep.subr.mxu0 0.0
    %490 = vmatpush1.msra.mxu0 0.0
    %491 = vmatprep.subr.mxu0 0.0
    %492 = vmatpush1.msra.mxu0 0.0
    %493 = vmatprep.subr.mxu0 0.0
    %494 = vmatpush1.msra.mxu0 0.0
    %495 = vmatprep.subr.mxu0 0.0
    %496 = vmatpush1.msra.mxu0 0.0
    %497 = vmatprep.mubr.f32.mxu0 0.0
    %498 = vmatmul.mubr.f32.gmra.mrb[0].mxu0 %v425
    %v499 = vpop.f32.mrb[0].mxu0
    %v500 = vadd.f32 0.0, %v499
    %v501 = vpop.f32.mrb[0].mxu0
    %502 = vmatprep.mubr.f32.mxu0 0.0
    %503 = vmatmul.mubr.f32.gmra.mrb[0].mxu0 %v426
    %v504 = vpop.f32.mrb[0].mxu0
    %v505 = vadd.f32 0.0, %v504
    %v506 = vpop.f32.mrb[0].mxu0
    %507 = vmatprep.mubr.f32.mxu0 0.0
    %508 = vmatmul.mubr.f32.gmra.mrb[0].mxu0 %v427
    %v509 = vpop.f32.mrb[0].mxu0
    %v510 = vadd.f32 0.0, %v509
    %v511 = vpop.f32.mrb[0].mxu0
    %512 = vmatprep.mubr.f32.mxu0 0.0
    %513 = vmatmul.mubr.f32.gmra.mrb[0].mxu0 %v428
    %v514 = vpop.f32.mrb[0].mxu0
    %v515 = vadd.f32 0.0, %v514
    %v516 = vpop.f32.mrb[0].mxu0
    %517 = vmatprep.mubr.f32.mxu0 0.0
    %518 = vmatmul.mubr.f32.gmra.mrb[0].mxu0 %v429
    %v519 = vpop.f32.mrb[0].mxu0
    %v520 = vadd.f32 0.0, %v519
    %v521 = vpop.f32.mrb[0].mxu0
    %522 = vmatprep.mubr.f32.mxu0 0.0
    %523 = vmatmul.mubr.f32.gmra.mrb[0].mxu0 %v430
    %v524 = vpop.f32.mrb[0].mxu0
    %v525 = vadd.f32 0.0, %v524
    %v526 = vpop.f32.mrb[0].mxu0
    %527 = vmatprep.mubr.f32.mxu0 0.0
    %528 = vmatmul.mubr.f32.gmra.mrb[0].mxu0 %v431
    %v529 = vpop.f32.mrb[0].mxu0
    %v530 = vadd.f32 0.0, %v529
    %v531 = vpop.f32.mrb[0].mxu0
    %532 = vmatprep.mubr.f32.mxu0 0.0
    %533 = vmatmul.mubr.f32.gmra.mrb[0].mxu0 %v432
    %v534 = vpop.f32.mrb[0].mxu0
    %v535 = vadd.f32 0.0, %v534
    %v536 = vpop.f32.mrb[0].mxu0
    %537 = vdwg.mxu0
    %v538 = vadd.f32 %v500, %v60
    %v539 = vadd.f32 %v505, %v67
    %v540 = vadd.f32 %v510, %v74
    %v541 = vadd.f32 %v515, %v81
    %v542 = vadd.f32 %v520, %v88
    %v543 = vadd.f32 %v525, %v95
    %v544 = vadd.f32 %v530, %v102
    %v545 = vadd.f32 %v535, %v109
    %vm546 = vcmask 31744
    %v547 = vsel %vm546, %v538, -inf
    %v548 = vrot.slane %v547, 4
    %v549 = vmax.f32 %v547, %v548
    %v550 = vrot.slane %v549, 2
    %v551 = vmax.f32 %v549, %v550
    %v552 = vrot.slane %v551, 1
    %v553 = vmax.f32 %v551, %v552
    %v554 = vsel %vm546, %v539, -inf
    %v555 = vrot.slane %v554, 4
    %v556 = vmax.f32 %v554, %v555
    %v557 = vrot.slane %v556, 2
    %v558 = vmax.f32 %v556, %v557
    %v559 = vrot.slane %v558, 1
    %v560 = vmax.f32 %v558, %v559
    %v561 = vsel %vm546, %v540, -inf
    %v562 = vrot.slane %v561, 4
    %v563 = vmax.f32 %v561, %v562
    %v564 = vrot.slane %v563, 2
    %v565 = vmax.f32 %v563, %v564
    %v566 = vrot.slane %v565, 1
    %v567 = vmax.f32 %v565, %v566
    %v568 = vsel %vm546, %v541, -inf
    %v569 = vrot.slane %v568, 4
    %v570 = vmax.f32 %v568, %v569
    %v571 = vrot.slane %v570, 2
    %v572 = vmax.f32 %v570, %v571
    %v573 = vrot.slane %v572, 1
    %v574 = vmax.f32 %v572, %v573
    %v575 = vsel %vm546, %v542, -inf
    %v576 = vrot.slane %v575, 4
    %v577 = vmax.f32 %v575, %v576
    %v578 = vrot.slane %v577, 2
    %v579 = vmax.f32 %v577, %v578
    %v580 = vrot.slane %v579, 1
    %v581 = vmax.f32 %v579, %v580
    %v582 = vsel %vm546, %v543, -inf
    %v583 = vrot.slane %v582, 4
    %v584 = vmax.f32 %v582, %v583
    %v585 = vrot.slane %v584, 2
    %v586 = vmax.f32 %v584, %v585
    %v587 = vrot.slane %v586, 1
    %v588 = vmax.f32 %v586, %v587
    %v589 = vsel %vm546, %v544, -inf
    %v590 = vrot.slane %v589, 4
    %v591 = vmax.f32 %v589, %v590
    %v592 = vrot.slane %v591, 2
    %v593 = vmax.f32 %v591, %v592
    %v594 = vrot.slane %v593, 1
    %v595 = vmax.f32 %v593, %v594
    %v596 = vsel %vm546, %v545, -inf
    %v597 = vrot.slane %v596, 4
    %v598 = vmax.f32 %v596, %v597
    %v599 = vrot.slane %v598, 2
    %v600 = vmax.f32 %v598, %v599
    %v601 = vrot.slane %v600, 1
    %v602 = vmax.f32 %v600, %v601
    %v603 = vsub.f32 %v538, %v553
    %v604 = vsub.f32 %v539, %v560
    %v605 = vsub.f32 %v540, %v567
    %v606 = vsub.f32 %v541, %v574
    %v607 = vsub.f32 %v542, %v581
    %v608 = vsub.f32 %v543, %v588
    %v609 = vsub.f32 %v544, %v595
    %v610 = vsub.f32 %v545, %v602
    %v611 = vmul.f32 %v603, 1.442695
    %v612 = vpow.pop %v611
    %v613 = vmul.f32 %v604, 1.442695
    %v614 = vpow.pop %v613
    %v615 = vmul.f32 %v605, 1.442695
    %v616 = vpow.pop %v615
    %v617 = vmul.f32 %v606, 1.442695
    %v618 = vpow.pop %v617
    %v619 = vmul.f32 %v607, 1.442695
    %v620 = vpow.pop %v619
    %v621 = vmul.f32 %v608, 1.442695
    %v622 = vpow.pop %v621
    %v623 = vmul.f32 %v609, 1.442695
    %v624 = vpow.pop %v623
    %v625 = vmul.f32 %v610, 1.442695
    %v626 = vpow.pop %v625
    %v627 = vsel %vm546, %v612, 0.0
    %v628 = vrot.slane %v627, 4
    %v629 = vadd.f32 %v627, %v628
    %v630 = vrot.slane %v629, 2
    %v631 = vadd.f32 %v629, %v630
    %v632 = vrot.slane %v631, 1
    %v633 = vadd.f32 %v631, %v632
    %v634 = vsel %vm546, %v614, 0.0
    %v635 = vrot.slane %v634, 4
    %v636 = vadd.f32 %v634, %v635
    %v637 = vrot.slane %v636, 2
    %v638 = vadd.f32 %v636, %v637
    %v639 = vrot.slane %v638, 1
    %v640 = vadd.f32 %v638, %v639
    %v641 = vsel %vm546, %v616, 0.0
    %v642 = vrot.slane %v641, 4
    %v643 = vadd.f32 %v641, %v642
    %v644 = vrot.slane %v643, 2
    %v645 = vadd.f32 %v643, %v644
    %v646 = vrot.slane %v645, 1
    %v647 = vadd.f32 %v645, %v646
    %v648 = vsel %vm546, %v618, 0.0
    %v649 = vrot.slane %v648, 4
    %v650 = vadd.f32 %v648, %v649
    %v651 = vrot.slane %v650, 2
    %v652 = vadd.f32 %v650, %v651
    %v653 = vrot.slane %v652, 1
    %v654 = vadd.f32 %v652, %v653
    %v655 = vsel %vm546, %v620, 0.0
    %v656 = vrot.slane %v655, 4
    %v657 = vadd.f32 %v655, %v656
    %v658 = vrot.slane %v657, 2
    %v659 = vadd.f32 %v657, %v658
    %v660 = vrot.slane %v659, 1
    %v661 = vadd.f32 %v659, %v660
    %v662 = vsel %vm546, %v622, 0.0
    %v663 = vrot.slane %v662, 4
    %v664 = vadd.f32 %v662, %v663
    %v665 = vrot.slane %v664, 2
    %v666 = vadd.f32 %v664, %v665
    %v667 = vrot.slane %v666, 1
    %v668 = vadd.f32 %v666, %v667
    %v669 = vsel %vm546, %v624, 0.0
    %v670 = vrot.slane %v669, 4
    %v671 = vadd.f32 %v669, %v670
    %v672 = vrot.slane %v671, 2
    %v673 = vadd.f32 %v671, %v672
    %v674 = vrot.slane %v673, 1
    %v675 = vadd.f32 %v673, %v674
    %v676 = vsel %vm546, %v626, 0.0
    %v677 = vrot.slane %v676, 4
    %v678 = vadd.f32 %v676, %v677
    %v679 = vrot.slane %v678, 2
    %v680 = vadd.f32 %v678, %v679
    %v681 = vrot.slane %v680, 1
    %v682 = vadd.f32 %v680, %v681
    %v683 = vrcp.pop %v633
    %v684 = vrcp.pop %v640
    %v685 = vrcp.pop %v647
    %v686 = vrcp.pop %v654
    %v687 = vrcp.pop %v661
    %v688 = vrcp.pop %v668
    %v689 = vrcp.pop %v675
    %v690 = vrcp.pop %v682
    %v691 = vmul.f32 %v612, %v683
    %v692 = vmul.f32 %v614, %v684
    %v693 = vmul.f32 %v616, %v685
    %v694 = vmul.f32 %v618, %v686
    %v695 = vmul.f32 %v620, %v687
    %v696 = vmul.f32 %v622, %v688
    %v697 = vmul.f32 %v624, %v689
    %v698 = vmul.f32 %v626, %v690
    %v700 = vcombine.high %v315, %v315
    %v702 = vunpack.c.l.s4 1966171168
    %v703 = vunpack.c.0.s8 %v702
    %v704 = vlaneseq
    %v705 = vshrl.u32 %v704, 7
    %v706 = vsub.s32 %v703, %v705
    %v707 = vrot.slane %v315, %v706
    %v709 = vunpack.c.l.s4 1966171168
    %v710 = vunpack.c.0.s8 %v709
    %v711 = vlaneseq
    %v712 = vshrl.u32 %v711, 7
    %v713 = vsub.s32 %v710, %v712
    %v714 = vrot.slane %v700, %v713
    %v715 = vcombine.high %v707, %v707
    %v716 = vcombine.high %v714, %v714
    %v718 = vunpack.c.l.s4 1966171168
    %v719 = vunpack.c.0.s8 %v718
    %v720 = vlaneseq
    %v721 = vshrl.u32 %v720, 7
    %v722 = vsub.s32 %v719, %v721
    %v723 = vrot.slane %v707, %v722
    %v725 = vunpack.c.l.s4 1966171168
    %v726 = vunpack.c.0.s8 %v725
    %v727 = vlaneseq
    %v728 = vshrl.u32 %v727, 7
    %v729 = vsub.s32 %v726, %v728
    %v730 = vrot.slane %v714, %v729
    %v732 = vunpack.c.l.s4 1966171168
    %v733 = vunpack.c.0.s8 %v732
    %v734 = vlaneseq
    %v735 = vshrl.u32 %v734, 7
    %v736 = vsub.s32 %v733, %v735
    %v737 = vrot.slane %v715, %v736
    %v739 = vunpack.c.l.s4 1966171168
    %v740 = vunpack.c.0.s8 %v739
    %v741 = vlaneseq
    %v742 = vshrl.u32 %v741, 7
    %v743 = vsub.s32 %v740, %v742
    %v744 = vrot.slane %v716, %v743
    %v745 = vcombine.high %v723, %v723
    %v746 = vcombine.high %v730, %v730
    %v747 = vcombine.high %v737, %v737
    %v748 = vcombine.high %v744, %v744
    %v749 = vlaneseq
    %v750 = vshrl.u32 %v749, 7
    %v751 = vsub.s32 0, %v750
    %v752 = vrot.slane %v723, %v751
    %v753 = vlaneseq
    %v754 = vshrl.u32 %v753, 7
    %v755 = vsub.s32 0, %v754
    %v756 = vrot.slane %v737, %v755
    %v757 = vlaneseq
    %v758 = vshrl.u32 %v757, 7
    %v759 = vsub.s32 0, %v758
    %v760 = vrot.slane %v745, %v759
    %v761 = vlaneseq
    %v762 = vshrl.u32 %v761, 7
    %v763 = vsub.s32 0, %v762
    %v764 = vrot.slane %v747, %v763
    %v765 = vlaneseq
    %v766 = vshrl.u32 %v765, 7
    %v767 = vsub.s32 0, %v766
    %v768 = vrot.slane %v730, %v767
    %v769 = vlaneseq
    %v770 = vshrl.u32 %v769, 7
    %v771 = vsub.s32 0, %v770
    %v772 = vrot.slane %v744, %v771
    %v773 = vlaneseq
    %v774 = vshrl.u32 %v773, 7
    %v775 = vsub.s32 0, %v774
    %v776 = vrot.slane %v746, %v775
    %v777 = vlaneseq
    %v778 = vshrl.u32 %v777, 7
    %v779 = vsub.s32 0, %v778
    %v780 = vrot.slane %v748, %v779
    %v789 = vmul.f32 %v752, %v189
    %v790 = vmul.f32 %v756, %v189
    %v791 = vmul.f32 %v760, %v189
    %v792 = vmul.f32 %v764, %v189
    %v793 = vmul.f32 %v768, %v189
    %v794 = vmul.f32 %v772, %v189
    %v795 = vmul.f32 %v776, %v189
    %v796 = vmul.f32 %v780, %v189
    %v797 = vcombine.low %v691, %v693
    %v798 = vcombine.high %v691, %v693
    %v800 = vunpack.c.l.s4 1983009808
    %v801 = vunpack.c.0.s8 %v800
    %v802 = vlaneseq
    %v803 = vshrl.u32 %v802, 7
    %v804 = vsub.s32 %v801, %v803
    %v805 = vrot.slane %v797, %v804
    %v807 = vunpack.c.l.s4 1983009808
    %v808 = vunpack.c.0.s8 %v807
    %v809 = vlaneseq
    %v810 = vshrl.u32 %v809, 7
    %v811 = vsub.s32 %v808, %v810
    %v812 = vrot.slane %v798, %v811
    %v813 = vcombine.low %v692, %v694
    %v814 = vcombine.high %v692, %v694
    %v816 = vunpack.c.l.s4 1983009808
    %v817 = vunpack.c.0.s8 %v816
    %v818 = vlaneseq
    %v819 = vshrl.u32 %v818, 7
    %v820 = vsub.s32 %v817, %v819
    %v821 = vrot.slane %v813, %v820
    %v823 = vunpack.c.l.s4 1983009808
    %v824 = vunpack.c.0.s8 %v823
    %v825 = vlaneseq
    %v826 = vshrl.u32 %v825, 7
    %v827 = vsub.s32 %v824, %v826
    %v828 = vrot.slane %v814, %v827
    %v829 = vcombine.low %v695, %v697
    %v830 = vcombine.high %v695, %v697
    %v832 = vunpack.c.l.s4 1983009808
    %v833 = vunpack.c.0.s8 %v832
    %v834 = vlaneseq
    %v835 = vshrl.u32 %v834, 7
    %v836 = vsub.s32 %v833, %v835
    %v837 = vrot.slane %v829, %v836
    %v839 = vunpack.c.l.s4 1983009808
    %v840 = vunpack.c.0.s8 %v839
    %v841 = vlaneseq
    %v842 = vshrl.u32 %v841, 7
    %v843 = vsub.s32 %v840, %v842
    %v844 = vrot.slane %v830, %v843
    %v845 = vcombine.low %v696, %v698
    %v846 = vcombine.high %v696, %v698
    %v848 = vunpack.c.l.s4 1983009808
    %v849 = vunpack.c.0.s8 %v848
    %v850 = vlaneseq
    %v851 = vshrl.u32 %v850, 7
    %v852 = vsub.s32 %v849, %v851
    %v853 = vrot.slane %v845, %v852
    %v855 = vunpack.c.l.s4 1983009808
    %v856 = vunpack.c.0.s8 %v855
    %v857 = vlaneseq
    %v858 = vshrl.u32 %v857, 7
    %v859 = vsub.s32 %v856, %v858
    %v860 = vrot.slane %v846, %v859
    %v861 = vcombine.low %v805, %v821
    %v862 = vcombine.high %v805, %v821
    %v864 = vunpack.c.l.s4 1934713408
    %v865 = vunpack.c.0.s8 %v864
    %v866 = vlaneseq
    %v867 = vshrl.u32 %v866, 7
    %v868 = vsub.s32 %v865, %v867
    %v869 = vrot.slane %v861, %v868
    %v871 = vunpack.c.l.s4 1934713408
    %v872 = vunpack.c.0.s8 %v871
    %v873 = vlaneseq
    %v874 = vshrl.u32 %v873, 7
    %v875 = vsub.s32 %v872, %v874
    %v876 = vrot.slane %v862, %v875
    %v877 = vcombine.low %v812, %v828
    %v878 = vcombine.high %v812, %v828
    %v880 = vunpack.c.l.s4 1934713408
    %v881 = vunpack.c.0.s8 %v880
    %v882 = vlaneseq
    %v883 = vshrl.u32 %v882, 7
    %v884 = vsub.s32 %v881, %v883
    %v885 = vrot.slane %v877, %v884
    %v887 = vunpack.c.l.s4 1934713408
    %v888 = vunpack.c.0.s8 %v887
    %v889 = vlaneseq
    %v890 = vshrl.u32 %v889, 7
    %v891 = vsub.s32 %v888, %v890
    %v892 = vrot.slane %v878, %v891
    %v893 = vcombine.low %v837, %v853
    %v894 = vcombine.high %v837, %v853
    %v896 = vunpack.c.l.s4 1934713408
    %v897 = vunpack.c.0.s8 %v896
    %v898 = vlaneseq
    %v899 = vshrl.u32 %v898, 7
    %v900 = vsub.s32 %v897, %v899
    %v901 = vrot.slane %v893, %v900
    %v903 = vunpack.c.l.s4 1934713408
    %v904 = vunpack.c.0.s8 %v903
    %v905 = vlaneseq
    %v906 = vshrl.u32 %v905, 7
    %v907 = vsub.s32 %v904, %v906
    %v908 = vrot.slane %v894, %v907
    %v909 = vcombine.low %v844, %v860
    %v910 = vcombine.high %v844, %v860
    %v912 = vunpack.c.l.s4 1934713408
    %v913 = vunpack.c.0.s8 %v912
    %v914 = vlaneseq
    %v915 = vshrl.u32 %v914, 7
    %v916 = vsub.s32 %v913, %v915
    %v917 = vrot.slane %v909, %v916
    %v919 = vunpack.c.l.s4 1934713408
    %v920 = vunpack.c.0.s8 %v919
    %v921 = vlaneseq
    %v922 = vshrl.u32 %v921, 7
    %v923 = vsub.s32 %v920, %v922
    %v924 = vrot.slane %v910, %v923
    %v925 = vcombine.low %v869, %v901
    %v926 = vcombine.high %v869, %v901
    %v927 = vcombine.low %v876, %v908
    %v928 = vcombine.high %v876, %v908
    %v929 = vcombine.low %v885, %v917
    %v930 = vcombine.high %v885, %v917
    %v931 = vcombine.low %v892, %v924
    %v932 = vcombine.high %v892, %v924
    %934 = vrot.lane.b32.xlu0 %v926, 4
    %v935 = vpop.permute.xlu0 %934
    %938 = vrot.lane.b32.xlu0 %v927, 8
    %v939 = vpop.permute.xlu0 %938
    %942 = vrot.lane.b32.xlu0 %v928, 12
    %v943 = vpop.permute.xlu0 %942
    %946 = vrot.lane.b32.xlu0 %v929, 16
    %v947 = vpop.permute.xlu0 %946
    %950 = vrot.lane.b32.xlu0 %v930, 20
    %v951 = vpop.permute.xlu0 %950
    %954 = vrot.lane.b32.xlu0 %v931, 24
    %v955 = vpop.permute.xlu0 %954
    %958 = vrot.lane.b32.xlu0 %v932, 28
    %v959 = vpop.permute.xlu0 %958
    %v961 = vsel %vm546, %v925, %v935
    %vm962 = vcmask 64512
    %v963 = vsel %vm962, %v961, %v939
    %vm964 = vcmask 97280
    %v965 = vsel %vm964, %v963, %v943
    %v966 = vsel %vm113, %v965, %v947
    %vm967 = vcmask 162816
    %v968 = vsel %vm967, %v966, %v951
    %vm969 = vcmask 195584
    %v970 = vsel %vm969, %v968, %v955
    %vm971 = vcmask 228352
    %v972 = vsel %vm971, %v970, %v959
    %v981 = vcombine.low %v789, %v790
    %v982 = vcombine.low %v791, %v792
    %v983 = vcombine.low %v793, %v794
    %v984 = vcombine.low %v795, %v796
    %v990 = vsel %vm244, %v972, 0
    %992 = vmatprep.subr.mxu0 0.0
    %993 = vmatpush1.msra.mxu0 %v981
    %994 = vmatprep.subr.mxu0 0.0
    %995 = vmatpush1.msra.mxu0 %v982
    %996 = vmatprep.subr.mxu0 0.0
    %997 = vmatpush1.msra.mxu0 %v983
    %998 = vmatprep.subr.mxu0 0.0
    %999 = vmatpush1.msra.mxu0 %v984
    %1000 = vmatprep.subr.mxu0 0.0
    %1001 = vmatpush1.msra.mxu0 0.0
    %1002 = vmatprep.subr.mxu0 0.0
    %1003 = vmatpush1.msra.mxu0 0.0
    %1004 = vmatprep.subr.mxu0 0.0
    %1005 = vmatpush1.msra.mxu0 0.0
    %1006 = vmatprep.subr.mxu0 0.0
    %1007 = vmatpush1.msra.mxu0 0.0
    %1008 = vmatprep.subr.mxu0 0.0
    %1009 = vmatpush1.msra.mxu0 0.0
    %1010 = vmatprep.subr.mxu0 0.0
    %1011 = vmatpush1.msra.mxu0 0.0
    %1012 = vmatprep.subr.mxu0 0.0
    %1013 = vmatpush1.msra.mxu0 0.0
    %1014 = vmatprep.subr.mxu0 0.0
    %1015 = vmatpush1.msra.mxu0 0.0
    %1016 = vmatprep.subr.mxu0 0.0
    %1017 = vmatpush1.msra.mxu0 0.0
    %1018 = vmatprep.subr.mxu0 0.0
    %1019 = vmatpush1.msra.mxu0 0.0
    %1020 = vmatprep.subr.mxu0 0.0
    %1021 = vmatpush1.msra.mxu0 0.0
    %1022 = vmatprep.subr.mxu0 0.0
    %1023 = vmatpush1.msra.mxu0 0.0
    %1024 = vmatprep.subr.mxu0 0.0
    %1025 = vmatpush1.msra.mxu0 0.0
    %1026 = vmatprep.subr.mxu0 0.0
    %1027 = vmatpush1.msra.mxu0 0.0
    %1028 = vmatprep.subr.mxu0 0.0
    %1029 = vmatpush1.msra.mxu0 0.0
    %1030 = vmatprep.subr.mxu0 0.0
    %1031 = vmatpush1.msra.mxu0 0.0
    %1032 = vmatprep.subr.mxu0 0.0
    %1033 = vmatpush1.msra.mxu0 0.0
    %1034 = vmatprep.subr.mxu0 0.0
    %1035 = vmatpush1.msra.mxu0 0.0
    %1036 = vmatprep.subr.mxu0 0.0
    %1037 = vmatpush1.msra.mxu0 0.0
    %1038 = vmatprep.subr.mxu0 0.0
    %1039 = vmatpush1.msra.mxu0 0.0
    %1040 = vmatprep.subr.mxu0 0.0
    %1041 = vmatpush1.msra.mxu0 0.0
    %1042 = vmatprep.subr.mxu0 0.0
    %1043 = vmatpush1.msra.mxu0 0.0
    %1044 = vmatprep.subr.mxu0 0.0
    %1045 = vmatpush1.msra.mxu0 0.0
    %1046 = vmatprep.subr.mxu0 0.0
    %1047 = vmatpush1.msra.mxu0 0.0
    %1048 = vmatprep.subr.mxu0 0.0
    %1049 = vmatpush1.msra.mxu0 0.0
    %1050 = vmatprep.subr.mxu0 0.0
    %1051 = vmatpush1.msra.mxu0 0.0
    %1052 = vmatprep.subr.mxu0 0.0
    %1053 = vmatpush1.msra.mxu0 0.0
    %1054 = vmatprep.subr.mxu0 0.0
    %1055 = vmatpush1.msra.mxu0 0.0
    %1056 = vmatprep.mubr.f32.mxu0 0.0
    %1057 = vmatmul.mubr.f32.gmra.mrb[0].mxu0 %v990
    %v1058 = vpop.f32.mrb[0].mxu0
    %v1059 = vadd.f32 0.0, %v1058
    %v1060 = vpop.f32.mrb[0].mxu0
    %1061 = vdwg.mxu0
    %1062 = vmatprep.subr.mxu0 0.0
    %1063 = vmatpush1.msra.mxu0 %v190
    %1064 = vmatprep.subr.mxu0 0.0
    %1065 = vmatpush1.msra.mxu0 %v191
    %1066 = vmatprep.subr.mxu0 0.0
    %1067 = vmatpush1.msra.mxu0 %v192
    %1068 = vmatprep.subr.mxu0 0.0
    %1069 = vmatpush1.msra.mxu0 %v193
    %1070 = vmatprep.subr.mxu0 0.0
    %1071 = vmatpush1.msra.mxu0 %v194
    %1072 = vmatprep.subr.mxu0 0.0
    %1073 = vmatpush1.msra.mxu0 %v195
    %1074 = vmatprep.subr.mxu0 0.0
    %1075 = vmatpush1.msra.mxu0 %v196
    %1076 = vmatprep.subr.mxu0 0.0
    %1077 = vmatpush1.msra.mxu0 %v197
    %1078 = vmatprep.subr.mxu0 0.0
    %1079 = vmatpush1.msra.mxu0 %v198
    %1080 = vmatprep.subr.mxu0 0.0
    %1081 = vmatpush1.msra.mxu0 %v199
    %1082 = vmatprep.subr.mxu0 0.0
    %1083 = vmatpush1.msra.mxu0 %v200
    %1084 = vmatprep.subr.mxu0 0.0
    %1085 = vmatpush1.msra.mxu0 %v201
    %1086 = vmatprep.subr.mxu0 0.0
    %1087 = vmatpush1.msra.mxu0 %v202
    %1088 = vmatprep.subr.mxu0 0.0
    %1089 = vmatpush1.msra.mxu0 %v203
    %1090 = vmatprep.subr.mxu0 0.0
    %1091 = vmatpush1.msra.mxu0 %v204
    %1092 = vmatprep.subr.mxu0 0.0
    %1093 = vmatpush1.msra.mxu0 %v205
    %1094 = vmatprep.subr.mxu0 0.0
    %1095 = vmatpush1.msra.mxu0 0.0
    %1096 = vmatprep.subr.mxu0 0.0
    %1097 = vmatpush1.msra.mxu0 0.0
    %1098 = vmatprep.subr.mxu0 0.0
    %1099 = vmatpush1.msra.mxu0 0.0
    %1100 = vmatprep.subr.mxu0 0.0
    %1101 = vmatpush1.msra.mxu0 0.0
    %1102 = vmatprep.subr.mxu0 0.0
    %1103 = vmatpush1.msra.mxu0 0.0
    %1104 = vmatprep.subr.mxu0 0.0
    %1105 = vmatpush1.msra.mxu0 0.0
    %1106 = vmatprep.subr.mxu0 0.0
    %1107 = vmatpush1.msra.mxu0 0.0
    %1108 = vmatprep.subr.mxu0 0.0
    %1109 = vmatpush1.msra.mxu0 0.0
    %1110 = vmatprep.subr.mxu0 0.0
    %1111 = vmatpush1.msra.mxu0 0.0
    %1112 = vmatprep.subr.mxu0 0.0
    %1113 = vmatpush1.msra.mxu0 0.0
    %1114 = vmatprep.subr.mxu0 0.0
    %1115 = vmatpush1.msra.mxu0 0.0
    %1116 = vmatprep.subr.mxu0 0.0
    %1117 = vmatpush1.msra.mxu0 0.0
    %1118 = vmatprep.subr.mxu0 0.0
    %1119 = vmatpush1.msra.mxu0 0.0
    %1120 = vmatprep.subr.mxu0 0.0
    %1121 = vmatpush1.msra.mxu0 0.0
    %1122 = vmatprep.subr.mxu0 0.0
    %1123 = vmatpush1.msra.mxu0 0.0
    %1124 = vmatprep.subr.mxu0 0.0
    %1125 = vmatpush1.msra.mxu0 0.0
    %1126 = vmatprep.mubr.f32.mxu0 0.0
    %1127 = vmatmul.mubr.f32.gmra.mrb[0].mxu0 %v1059
    %v1128 = vpop.f32.mrb[0].mxu0
    %v1129 = vadd.f32 %v216, %v1128
    %v1130 = vpop.f32.mrb[0].mxu0
    %1131 = vdwg.mxu0
    %v1132 = vmul.f32 %v1129, 0.01
    %v1133 = vmax.f32 %v1129, %v1132
    %v1134 = vld [vmem:[#allocation7 + $0x60] sm:$0xff]
    %v1135 = vld [vmem:[#allocation7 + $0x68] sm:$0xff]
    %v1136 = vld [vmem:[#allocation7 + $0x70] sm:$0xff]
    %v1137 = vld [vmem:[#allocation7 + $0x78] sm:$0xff]
    %v1138 = vld [vmem:[#allocation7 + $0x80] sm:$0xff]
    %v1139 = vld [vmem:[#allocation7 + $0x88] sm:$0xff]
    %v1140 = vld [vmem:[#allocation7 + $0x90] sm:$0xff]
    %v1141 = vld [vmem:[#allocation7 + $0x98] sm:$0xff]
    %s1142 = scalar_lea.vmem [#allocation7], 227
    %v1143 = vld [vmem:[%s1142] ss:$8 sm:$0x3]
    %v1144 = vld [vmem:[#allocation7 + $0xe4] ss:$0 sm:$0xff]
    %v1145 = vld [vmem:[#allocation7 + $0xf8] sm:$0xff]
    %v1146 = vld [vmem:[#allocation7 + $0x108] sm:$0xff]
    %v1147 = vld [vmem:[#allocation7 + $0x118] sm:$0xff]
    %v1148 = vld [vmem:[#allocation7 + $0x128] sm:$0xff]
    %v1149 = vld [vmem:[#allocation7 + $0x138] sm:$0xff]
    %v1150 = vld [vmem:[#allocation7 + $0x148] sm:$0xff]
    %v1151 = vld [vmem:[#allocation7 + $0x158] sm:$0xff]
    %v1152 = vld [vmem:[#allocation7 + $0x168] sm:$0xff]
    %v1153 = vld [vmem:[#allocation7 + $0x178] sm:$0xff]
    %v1154 = vld [vmem:[#allocation7 + $0x188] sm:$0xff]
    %v1155 = vld [vmem:[#allocation7 + $0x198] sm:$0xff]
    %v1156 = vld [vmem:[#allocation7 + $0x1a8] sm:$0xff]
    %v1157 = vld [vmem:[#allocation7 + $0x1b8] sm:$0xff]
    %v1158 = vld [vmem:[#allocation7 + $0x1c8] sm:$0xff]
    %v1159 = vld [vmem:[#allocation7 + $0x1d8] sm:$0xff]
    %v1160 = vld [vmem:[#allocation7 + $0x1e8] sm:$0xff]
    %v1162 = vlaneseq
    %v1163 = vshrl.u32 %v1162, 7
    %v1164 = vsub.s32 0, %v1163
    %v1165 = vrot.slane %v1143, %v1164
    %v1166 = vlaneseq
    %v1167 = vshrl.u32 %v1166, 7
    %v1168 = vsub.s32 1, %v1167
    %v1169 = vrot.slane %v1143, %v1168
    %v1173 = vsel %vm244, %v1133, 0
    %1175 = vmatprep.subr.mxu0 %v1135
    %1176 = vmatpush1.msra.mxu0 %v1134
    %1177 = vmatprep.subr.mxu0 %v1137
    %1178 = vmatpush1.msra.mxu0 %v1136
    %1179 = vmatprep.subr.mxu0 %v1139
    %1180 = vmatpush1.msra.mxu0 %v1138
    %1181 = vmatprep.subr.mxu0 %v1141
    %1182 = vmatpush1.msra.mxu0 %v1140
    %1183 = vmatprep.subr.mxu0 0.0
    %1184 = vmatpush1.msra.mxu0 0.0
    %1185 = vmatprep.subr.mxu0 0.0
    %1186 = vmatpush1.msra.mxu0 0.0
    %1187 = vmatprep.subr.mxu0 0.0
    %1188 = vmatpush1.msra.mxu0 0.0
    %1189 = vmatprep.subr.mxu0 0.0
    %1190 = vmatpush1.msra.mxu0 0.0
    %1191 = vmatprep.subr.mxu0 0.0
    %1192 = vmatpush1.msra.mxu0 0.0
    %1193 = vmatprep.subr.mxu0 0.0
    %1194 = vmatpush1.msra.mxu0 0.0
    %1195 = vmatprep.subr.mxu0 0.0
    %1196 = vmatpush1.msra.mxu0 0.0
    %1197 = vmatprep.subr.mxu0 0.0
    %1198 = vmatpush1.msra.mxu0 0.0
    %1199 = vmatprep.subr.mxu0 0.0
    %1200 = vmatpush1.msra.mxu0 0.0
    %1201 = vmatprep.subr.mxu0 0.0
    %1202 = vmatpush1.msra.mxu0 0.0
    %1203 = vmatprep.subr.mxu0 0.0
    %1204 = vmatpush1.msra.mxu0 0.0
    %1205 = vmatprep.subr.mxu0 0.0
    %1206 = vmatpush1.msra.mxu0 0.0
    %1207 = vmatprep.subr.mxu0 0.0
    %1208 = vmatpush1.msra.mxu0 0.0
    %1209 = vmatprep.subr.mxu0 0.0
    %1210 = vmatpush1.msra.mxu0 0.0
    %1211 = vmatprep.subr.mxu0 0.0
    %1212 = vmatpush1.msra.mxu0 0.0
    %1213 = vmatprep.subr.mxu0 0.0
    %1214 = vmatpush1.msra.mxu0 0.0
    %1215 = vmatprep.subr.mxu0 0.0
    %1216 = vmatpush1.msra.mxu0 0.0
    %1217 = vmatprep.subr.mxu0 0.0
    %1218 = vmatpush1.msra.mxu0 0.0
    %1219 = vmatprep.subr.mxu0 0.0
    %1220 = vmatpush1.msra.mxu0 0.0
    %1221 = vmatprep.subr.mxu0 0.0
    %1222 = vmatpush1.msra.mxu0 0.0
    %1223 = vmatprep.subr.mxu0 0.0
    %1224 = vmatpush1.msra.mxu0 0.0
    %1225 = vmatprep.subr.mxu0 0.0
    %1226 = vmatpush1.msra.mxu0 0.0
    %1227 = vmatprep.subr.mxu0 0.0
    %1228 = vmatpush1.msra.mxu0 0.0
    %1229 = vmatprep.subr.mxu0 0.0
    %1230 = vmatpush1.msra.mxu0 0.0
    %1231 = vmatprep.subr.mxu0 0.0
    %1232 = vmatpush1.msra.mxu0 0.0
    %1233 = vmatprep.subr.mxu0 0.0
    %1234 = vmatpush1.msra.mxu0 0.0
    %1235 = vmatprep.subr.mxu0 0.0
    %1236 = vmatpush1.msra.mxu0 0.0
    %1237 = vmatprep.subr.mxu0 0.0
    %1238 = vmatpush1.msra.mxu0 0.0
    %1239 = vmatprep.mubr.f32.mxu0 0.0
    %1240 = vmatmul.mubr.f32.gmra.mrb[0].mxu0 %v1173
    %v1241 = vpop.f32.mrb[0].mxu0
    %v1242 = vadd.f32 %v1165, %v1241
    %v1243 = vpop.f32.mrb[0].mxu0
    %v1244 = vadd.f32 %v1169, %v1243
    %1245 = vdwg.mxu0
    %v1247 = vcombine.high %v1244, %v1244
    %v1249 = vunpack.c.l.s4 1966171168
    %v1250 = vunpack.c.0.s8 %v1249
    %v1251 = vlaneseq
    %v1252 = vshrl.u32 %v1251, 7
    %v1253 = vsub.s32 %v1250, %v1252
    %v1254 = vrot.slane %v1244, %v1253
    %v1256 = vunpack.c.l.s4 1966171168
    %v1257 = vunpack.c.0.s8 %v1256
    %v1258 = vlaneseq
    %v1259 = vshrl.u32 %v1258, 7
    %v1260 = vsub.s32 %v1257, %v1259
    %v1261 = vrot.slane %v1247, %v1260
    %v1262 = vcombine.high %v1254, %v1254
    %v1263 = vcombine.high %v1261, %v1261
    %v1265 = vunpack.c.l.s4 1966171168
    %v1266 = vunpack.c.0.s8 %v1265
    %v1267 = vlaneseq
    %v1268 = vshrl.u32 %v1267, 7
    %v1269 = vsub.s32 %v1266, %v1268
    %v1270 = vrot.slane %v1254, %v1269
    %v1272 = vunpack.c.l.s4 1966171168
    %v1273 = vunpack.c.0.s8 %v1272
    %v1274 = vlaneseq
    %v1275 = vshrl.u32 %v1274, 7
    %v1276 = vsub.s32 %v1273, %v1275
    %v1277 = vrot.slane %v1261, %v1276
    %v1279 = vunpack.c.l.s4 1966171168
    %v1280 = vunpack.c.0.s8 %v1279
    %v1281 = vlaneseq
    %v1282 = vshrl.u32 %v1281, 7
    %v1283 = vsub.s32 %v1280, %v1282
    %v1284 = vrot.slane %v1262, %v1283
    %v1286 = vunpack.c.l.s4 1966171168
    %v1287 = vunpack.c.0.s8 %v1286
    %v1288 = vlaneseq
    %v1289 = vshrl.u32 %v1288, 7
    %v1290 = vsub.s32 %v1287, %v1289
    %v1291 = vrot.slane %v1263, %v1290
    %v1292 = vcombine.high %v1270, %v1270
    %v1293 = vcombine.high %v1277, %v1277
    %v1294 = vcombine.high %v1284, %v1284
    %v1295 = vcombine.high %v1291, %v1291
    %v1296 = vlaneseq
    %v1297 = vshrl.u32 %v1296, 7
    %v1298 = vsub.s32 0, %v1297
    %v1299 = vrot.slane %v1270, %v1298
    %v1300 = vlaneseq
    %v1301 = vshrl.u32 %v1300, 7
    %v1302 = vsub.s32 0, %v1301
    %v1303 = vrot.slane %v1284, %v1302
    %v1304 = vlaneseq
    %v1305 = vshrl.u32 %v1304, 7
    %v1306 = vsub.s32 0, %v1305
    %v1307 = vrot.slane %v1292, %v1306
    %v1308 = vlaneseq
    %v1309 = vshrl.u32 %v1308, 7
    %v1310 = vsub.s32 0, %v1309
    %v1311 = vrot.slane %v1294, %v1310
    %v1312 = vlaneseq
    %v1313 = vshrl.u32 %v1312, 7
    %v1314 = vsub.s32 0, %v1313
    %v1315 = vrot.slane %v1277, %v1314
    %v1316 = vlaneseq
    %v1317 = vshrl.u32 %v1316, 7
    %v1318 = vsub.s32 0, %v1317
    %v1319 = vrot.slane %v1291, %v1318
    %v1320 = vlaneseq
    %v1321 = vshrl.u32 %v1320, 7
    %v1322 = vsub.s32 0, %v1321
    %v1323 = vrot.slane %v1293, %v1322
    %v1324 = vlaneseq
    %v1325 = vshrl.u32 %v1324, 7
    %v1326 = vsub.s32 0, %v1325
    %v1327 = vrot.slane %v1295, %v1326
    %v1336 = vadd.f32 %v1299, %v1242
    %v1337 = vadd.f32 %v1303, %v1242
    %v1338 = vadd.f32 %v1307, %v1242
    %v1339 = vadd.f32 %v1311, %v1242
    %v1340 = vadd.f32 %v1315, %v1242
    %v1341 = vadd.f32 %v1319, %v1242
    %v1342 = vadd.f32 %v1323, %v1242
    %v1343 = vadd.f32 %v1327, %v1242
    %v1344 = vmul.f32 %v1336, 0.2
    %v1345 = vmul.f32 %v1337, 0.2
    %v1346 = vmul.f32 %v1338, 0.2
    %v1347 = vmul.f32 %v1339, 0.2
    %v1348 = vmul.f32 %v1340, 0.2
    %v1349 = vmul.f32 %v1341, 0.2
    %v1350 = vmul.f32 %v1342, 0.2
    %v1351 = vmul.f32 %v1343, 0.2
    %v1352 = vmax.f32 %v1336, %v1344
    %v1353 = vmax.f32 %v1337, %v1345
    %v1354 = vmax.f32 %v1338, %v1346
    %v1355 = vmax.f32 %v1339, %v1347
    %v1356 = vmax.f32 %v1340, %v1348
    %v1357 = vmax.f32 %v1341, %v1349
    %v1358 = vmax.f32 %v1342, %v1350
    %v1359 = vmax.f32 %v1343, %v1351
    %1360 = vmatprep.subr.mxu0 0.0
    %1361 = vmatpush1.msra.mxu0 %v1145
    %1362 = vmatprep.subr.mxu0 0.0
    %1363 = vmatpush1.msra.mxu0 %v1146
    %1364 = vmatprep.subr.mxu0 0.0
    %1365 = vmatpush1.msra.mxu0 %v1147
    %1366 = vmatprep.subr.mxu0 0.0
    %1367 = vmatpush1.msra.mxu0 %v1148
    %1368 = vmatprep.subr.mxu0 0.0
    %1369 = vmatpush1.msra.mxu0 %v1149
    %1370 = vmatprep.subr.mxu0 0.0
    %1371 = vmatpush1.msra.mxu0 %v1150
    %1372 = vmatprep.subr.mxu0 0.0
    %1373 = vmatpush1.msra.mxu0 %v1151
    %1374 = vmatprep.subr.mxu0 0.0
    %1375 = vmatpush1.msra.mxu0 %v1152
    %1376 = vmatprep.subr.mxu0 0.0
    %1377 = vmatpush1.msra.mxu0 %v1153
    %1378 = vmatprep.subr.mxu0 0.0
    %1379 = vmatpush1.msra.mxu0 %v1154
    %1380 = vmatprep.subr.mxu0 0.0
    %1381 = vmatpush1.msra.mxu0 %v1155
    %1382 = vmatprep.subr.mxu0 0.0
    %1383 = vmatpush1.msra.mxu0 %v1156
    %1384 = vmatprep.subr.mxu0 0.0
    %1385 = vmatpush1.msra.mxu0 %v1157
    %1386 = vmatprep.subr.mxu0 0.0
    %1387 = vmatpush1.msra.mxu0 %v1158
    %1388 = vmatprep.subr.mxu0 0.0
    %1389 = vmatpush1.msra.mxu0 %v1159
    %1390 = vmatprep.subr.mxu0 0.0
    %1391 = vmatpush1.msra.mxu0 %v1160
    %1392 = vmatprep.subr.mxu0 0.0
    %1393 = vmatpush1.msra.mxu0 0.0
    %1394 = vmatprep.subr.mxu0 0.0
    %1395 = vmatpush1.msra.mxu0 0.0
    %1396 = vmatprep.subr.mxu0 0.0
    %1397 = vmatpush1.msra.mxu0 0.0
    %1398 = vmatprep.subr.mxu0 0.0
    %1399 = vmatpush1.msra.mxu0 0.0
    %1400 = vmatprep.subr.mxu0 0.0
    %1401 = vmatpush1.msra.mxu0 0.0
    %1402 = vmatprep.subr.mxu0 0.0
    %1403 = vmatpush1.msra.mxu0 0.0
    %1404 = vmatprep.subr.mxu0 0.0
    %1405 = vmatpush1.msra.mxu0 0.0
    %1406 = vmatprep.subr.mxu0 0.0
    %1407 = vmatpush1.msra.mxu0 0.0
    %1408 = vmatprep.subr.mxu0 0.0
    %1409 = vmatpush1.msra.mxu0 0.0
    %1410 = vmatprep.subr.mxu0 0.0
    %1411 = vmatpush1.msra.mxu0 0.0
    %1412 = vmatprep.subr.mxu0 0.0
    %1413 = vmatpush1.msra.mxu0 0.0
    %1414 = vmatprep.subr.mxu0 0.0
    %1415 = vmatpush1.msra.mxu0 0.0
    %1416 = vmatprep.subr.mxu0 0.0
    %1417 = vmatpush1.msra.mxu0 0.0
    %1418 = vmatprep.subr.mxu0 0.0
    %1419 = vmatpush1.msra.mxu0 0.0
    %1420 = vmatprep.subr.mxu0 0.0
    %1421 = vmatpush1.msra.mxu0 0.0
    %1422 = vmatprep.subr.mxu0 0.0
    %1423 = vmatpush1.msra.mxu0 0.0
    %1424 = vmatprep.mubr.f32.mxu0 0.0
    %1425 = vmatmul.mubr.f32.gmra.mrb[0].mxu0 %v1352
    %v1426 = vpop.f32.mrb[0].mxu0
    %v1427 = vadd.f32 0.0, %v1426
    %v1428 = vpop.f32.mrb[0].mxu0
    %1429 = vmatprep.mubr.f32.mxu0 0.0
    %1430 = vmatmul.mubr.f32.gmra.mrb[0].mxu0 %v1353
    %v1431 = vpop.f32.mrb[0].mxu0
    %v1432 = vadd.f32 0.0, %v1431
    %v1433 = vpop.f32.mrb[0].mxu0
    %1434 = vmatprep.mubr.f32.mxu0 0.0
    %1435 = vmatmul.mubr.f32.gmra.mrb[0].mxu0 %v1354
    %v1436 = vpop.f32.mrb[0].mxu0
    %v1437 = vadd.f32 0.0, %v1436
    %v1438 = vpop.f32.mrb[0].mxu0
    %1439 = vmatprep.mubr.f32.mxu0 0.0
    %1440 = vmatmul.mubr.f32.gmra.mrb[0].mxu0 %v1355
    %v1441 = vpop.f32.mrb[0].mxu0
    %v1442 = vadd.f32 0.0, %v1441
    %v1443 = vpop.f32.mrb[0].mxu0
    %1444 = vmatprep.mubr.f32.mxu0 0.0
    %1445 = vmatmul.mubr.f32.gmra.mrb[0].mxu0 %v1356
    %v1446 = vpop.f32.mrb[0].mxu0
    %v1447 = vadd.f32 0.0, %v1446
    %v1448 = vpop.f32.mrb[0].mxu0
    %1449 = vmatprep.mubr.f32.mxu0 0.0
    %1450 = vmatmul.mubr.f32.gmra.mrb[0].mxu0 %v1357
    %v1451 = vpop.f32.mrb[0].mxu0
    %v1452 = vadd.f32 0.0, %v1451
    %v1453 = vpop.f32.mrb[0].mxu0
    %1454 = vmatprep.mubr.f32.mxu0 0.0
    %1455 = vmatmul.mubr.f32.gmra.mrb[0].mxu0 %v1358
    %v1456 = vpop.f32.mrb[0].mxu0
    %v1457 = vadd.f32 0.0, %v1456
    %v1458 = vpop.f32.mrb[0].mxu0
    %1459 = vmatprep.mubr.f32.mxu0 0.0
    %1460 = vmatmul.mubr.f32.gmra.mrb[0].mxu0 %v1359
    %v1461 = vpop.f32.mrb[0].mxu0
    %v1462 = vadd.f32 0.0, %v1461
    %v1463 = vpop.f32.mrb[0].mxu0
    %1464 = vdwg.mxu0
    %v1465 = vadd.f32 %v1427, %v60
    %v1466 = vadd.f32 %v1432, %v67
    %v1467 = vadd.f32 %v1437, %v74
    %v1468 = vadd.f32 %v1442, %v81
    %v1469 = vadd.f32 %v1447, %v88
    %v1470 = vadd.f32 %v1452, %v95
    %v1471 = vadd.f32 %v1457, %v102
    %v1472 = vadd.f32 %v1462, %v109
    %v1473 = vsel %vm546, %v1465, -inf
    %v1474 = vrot.slane %v1473, 4
    %v1475 = vmax.f32 %v1473, %v1474
    %v1476 = vrot.slane %v1475, 2
    %v1477 = vmax.f32 %v1475, %v1476
    %v1478 = vrot.slane %v1477, 1
    %v1479 = vmax.f32 %v1477, %v1478
    %v1480 = vsel %vm546, %v1466, -inf
    %v1481 = vrot.slane %v1480, 4
    %v1482 = vmax.f32 %v1480, %v1481
    %v1483 = vrot.slane %v1482, 2
    %v1484 = vmax.f32 %v1482, %v1483
    %v1485 = vrot.slane %v1484, 1
    %v1486 = vmax.f32 %v1484, %v1485
    %v1487 = vsel %vm546, %v1467, -inf
    %v1488 = vrot.slane %v1487, 4
    %v1489 = vmax.f32 %v1487, %v1488
    %v1490 = vrot.slane %v1489, 2
    %v1491 = vmax.f32 %v1489, %v1490
    %v1492 = vrot.slane %v1491, 1
    %v1493 = vmax.f32 %v1491, %v1492
    %v1494 = vsel %vm546, %v1468, -inf
    %v1495 = vrot.slane %v1494, 4
    %v1496 = vmax.f32 %v1494, %v1495
    %v1497 = vrot.slane %v1496, 2
    %v1498 = vmax.f32 %v1496, %v1497
    %v1499 = vrot.slane %v1498, 1
    %v1500 = vmax.f32 %v1498, %v1499
    %v1501 = vsel %vm546, %v1469, -inf
    %v1502 = vrot.slane %v1501, 4
    %v1503 = vmax.f32 %v1501, %v1502
    %v1504 = vrot.slane %v1503, 2
    %v1505 = vmax.f32 %v1503, %v1504
    %v1506 = vrot.slane %v1505, 1
    %v1507 = vmax.f32 %v1505, %v1506
    %v1508 = vsel %vm546, %v1470, -inf
    %v1509 = vrot.slane %v1508, 4
    %v1510 = vmax.f32 %v1508, %v1509
    %v1511 = vrot.slane %v1510, 2
    %v1512 = vmax.f32 %v1510, %v1511
    %v1513 = vrot.slane %v1512, 1
    %v1514 = vmax.f32 %v1512, %v1513
    %v1515 = vsel %vm546, %v1471, -inf
    %v1516 = vrot.slane %v1515, 4
    %v1517 = vmax.f32 %v1515, %v1516
    %v1518 = vrot.slane %v1517, 2
    %v1519 = vmax.f32 %v1517, %v1518
    %v1520 = vrot.slane %v1519, 1
    %v1521 = vmax.f32 %v1519, %v1520
    %v1522 = vsel %vm546, %v1472, -inf
    %v1523 = vrot.slane %v1522, 4
    %v1524 = vmax.f32 %v1522, %v1523
    %v1525 = vrot.slane %v1524, 2
    %v1526 = vmax.f32 %v1524, %v1525
    %v1527 = vrot.slane %v1526, 1
    %v1528 = vmax.f32 %v1526, %v1527
    %v1529 = vsub.f32 %v1465, %v1479
    %v1530 = vsub.f32 %v1466, %v1486
    %v1531 = vsub.f32 %v1467, %v1493
    %v1532 = vsub.f32 %v1468, %v1500
    %v1533 = vsub.f32 %v1469, %v1507
    %v1534 = vsub.f32 %v1470, %v1514
    %v1535 = vsub.f32 %v1471, %v1521
    %v1536 = vsub.f32 %v1472, %v1528
    %v1537 = vmul.f32 %v1529, 1.442695
    %v1538 = vpow.pop %v1537
    %v1539 = vmul.f32 %v1530, 1.442695
    %v1540 = vpow.pop %v1539
    %v1541 = vmul.f32 %v1531, 1.442695
    %v1542 = vpow.pop %v1541
    %v1543 = vmul.f32 %v1532, 1.442695
    %v1544 = vpow.pop %v1543
    %v1545 = vmul.f32 %v1533, 1.442695
    %v1546 = vpow.pop %v1545
    %v1547 = vmul.f32 %v1534, 1.442695
    %v1548 = vpow.pop %v1547
    %v1549 = vmul.f32 %v1535, 1.442695
    %v1550 = vpow.pop %v1549
    %v1551 = vmul.f32 %v1536, 1.442695
    %v1552 = vpow.pop %v1551
    %v1553 = vsel %vm546, %v1538, 0.0
    %v1554 = vrot.slane %v1553, 4
    %v1555 = vadd.f32 %v1553, %v1554
    %v1556 = vrot.slane %v1555, 2
    %v1557 = vadd.f32 %v1555, %v1556
    %v1558 = vrot.slane %v1557, 1
    %v1559 = vadd.f32 %v1557, %v1558
    %v1560 = vsel %vm546, %v1540, 0.0
    %v1561 = vrot.slane %v1560, 4
    %v1562 = vadd.f32 %v1560, %v1561
    %v1563 = vrot.slane %v1562, 2
    %v1564 = vadd.f32 %v1562, %v1563
    %v1565 = vrot.slane %v1564, 1
    %v1566 = vadd.f32 %v1564, %v1565
    %v1567 = vsel %vm546, %v1542, 0.0
    %v1568 = vrot.slane %v1567, 4
    %v1569 = vadd.f32 %v1567, %v1568
    %v1570 = vrot.slane %v1569, 2
    %v1571 = vadd.f32 %v1569, %v1570
    %v1572 = vrot.slane %v1571, 1
    %v1573 = vadd.f32 %v1571, %v1572
    %v1574 = vsel %vm546, %v1544, 0.0
    %v1575 = vrot.slane %v1574, 4
    %v1576 = vadd.f32 %v1574, %v1575
    %v1577 = vrot.slane %v1576, 2
    %v1578 = vadd.f32 %v1576, %v1577
    %v1579 = vrot.slane %v1578, 1
    %v1580 = vadd.f32 %v1578, %v1579
    %v1581 = vsel %vm546, %v1546, 0.0
    %v1582 = vrot.slane %v1581, 4
    %v1583 = vadd.f32 %v1581, %v1582
    %v1584 = vrot.slane %v1583, 2
    %v1585 = vadd.f32 %v1583, %v1584
    %v1586 = vrot.slane %v1585, 1
    %v1587 = vadd.f32 %v1585, %v1586
    %v1588 = vsel %vm546, %v1548, 0.0
    %v1589 = vrot.slane %v1588, 4
    %v1590 = vadd.f32 %v1588, %v1589
    %v1591 = vrot.slane %v1590, 2
    %v1592 = vadd.f32 %v1590, %v1591
    %v1593 = vrot.slane %v1592, 1
    %v1594 = vadd.f32 %v1592, %v1593
    %v1595 = vsel %vm546, %v1550, 0.0
    %v1596 = vrot.slane %v1595, 4
    %v1597 = vadd.f32 %v1595, %v1596
    %v1598 = vrot.slane %v1597, 2
    %v1599 = vadd.f32 %v1597, %v1598
    %v1600 = vrot.slane %v1599, 1
    %v1601 = vadd.f32 %v1599, %v1600
    %v1602 = vsel %vm546, %v1552, 0.0
    %v1603 = vrot.slane %v1602, 4
    %v1604 = vadd.f32 %v1602, %v1603
    %v1605 = vrot.slane %v1604, 2
    %v1606 = vadd.f32 %v1604, %v1605
    %v1607 = vrot.slane %v1606, 1
    %v1608 = vadd.f32 %v1606, %v1607
    %v1609 = vrcp.pop %v1559
    %v1610 = vrcp.pop %v1566
    %v1611 = vrcp.pop %v1573
    %v1612 = vrcp.pop %v1580
    %v1613 = vrcp.pop %v1587
    %v1614 = vrcp.pop %v1594
    %v1615 = vrcp.pop %v1601
    %v1616 = vrcp.pop %v1608
    %v1617 = vmul.f32 %v1538, %v1609
    %v1618 = vmul.f32 %v1540, %v1610
    %v1619 = vmul.f32 %v1542, %v1611
    %v1620 = vmul.f32 %v1544, %v1612
    %v1621 = vmul.f32 %v1546, %v1613
    %v1622 = vmul.f32 %v1548, %v1614
    %v1623 = vmul.f32 %v1550, %v1615
    %v1624 = vmul.f32 %v1552, %v1616
    %v1626 = vcombine.high %v1242, %v1242
    %v1628 = vunpack.c.l.s4 1966171168
    %v1629 = vunpack.c.0.s8 %v1628
    %v1630 = vlaneseq
    %v1631 = vshrl.u32 %v1630, 7
    %v1632 = vsub.s32 %v1629, %v1631
    %v1633 = vrot.slane %v1242, %v1632
    %v1635 = vunpack.c.l.s4 1966171168
    %v1636 = vunpack.c.0.s8 %v1635
    %v1637 = vlaneseq
    %v1638 = vshrl.u32 %v1637, 7
    %v1639 = vsub.s32 %v1636, %v1638
    %v1640 = vrot.slane %v1626, %v1639
    %v1641 = vcombine.high %v1633, %v1633
    %v1642 = vcombine.high %v1640, %v1640
    %v1644 = vunpack.c.l.s4 1966171168
    %v1645 = vunpack.c.0.s8 %v1644
    %v1646 = vlaneseq
    %v1647 = vshrl.u32 %v1646, 7
    %v1648 = vsub.s32 %v1645, %v1647
    %v1649 = vrot.slane %v1633, %v1648
    %v1651 = vunpack.c.l.s4 1966171168
    %v1652 = vunpack.c.0.s8 %v1651
    %v1653 = vlaneseq
    %v1654 = vshrl.u32 %v1653, 7
    %v1655 = vsub.s32 %v1652, %v1654
    %v1656 = vrot.slane %v1640, %v1655
    %v1658 = vunpack.c.l.s4 1966171168
    %v1659 = vunpack.c.0.s8 %v1658
    %v1660 = vlaneseq
    %v1661 = vshrl.u32 %v1660, 7
    %v1662 = vsub.s32 %v1659, %v1661
    %v1663 = vrot.slane %v1641, %v1662
    %v1665 = vunpack.c.l.s4 1966171168
    %v1666 = vunpack.c.0.s8 %v1665
    %v1667 = vlaneseq
    %v1668 = vshrl.u32 %v1667, 7
    %v1669 = vsub.s32 %v1666, %v1668
    %v1670 = vrot.slane %v1642, %v1669
    %v1671 = vcombine.high %v1649, %v1649
    %v1672 = vcombine.high %v1656, %v1656
    %v1673 = vcombine.high %v1663, %v1663
    %v1674 = vcombine.high %v1670, %v1670
    %v1675 = vlaneseq
    %v1676 = vshrl.u32 %v1675, 7
    %v1677 = vsub.s32 0, %v1676
    %v1678 = vrot.slane %v1649, %v1677
    %v1679 = vlaneseq
    %v1680 = vshrl.u32 %v1679, 7
    %v1681 = vsub.s32 0, %v1680
    %v1682 = vrot.slane %v1663, %v1681
    %v1683 = vlaneseq
    %v1684 = vshrl.u32 %v1683, 7
    %v1685 = vsub.s32 0, %v1684
    %v1686 = vrot.slane %v1671, %v1685
    %v1687 = vlaneseq
    %v1688 = vshrl.u32 %v1687, 7
    %v1689 = vsub.s32 0, %v1688
    %v1690 = vrot.slane %v1673, %v1689
    %v1691 = vlaneseq
    %v1692 = vshrl.u32 %v1691, 7
    %v1693 = vsub.s32 0, %v1692
    %v1694 = vrot.slane %v1656, %v1693
    %v1695 = vlaneseq
    %v1696 = vshrl.u32 %v1695, 7
    %v1697 = vsub.s32 0, %v1696
    %v1698 = vrot.slane %v1670, %v1697
    %v1699 = vlaneseq
    %v1700 = vshrl.u32 %v1699, 7
    %v1701 = vsub.s32 0, %v1700
    %v1702 = vrot.slane %v1672, %v1701
    %v1703 = vlaneseq
    %v1704 = vshrl.u32 %v1703, 7
    %v1705 = vsub.s32 0, %v1704
    %v1706 = vrot.slane %v1674, %v1705
    %v1715 = vmul.f32 %v1678, %v189
    %v1716 = vmul.f32 %v1682, %v189
    %v1717 = vmul.f32 %v1686, %v189
    %v1718 = vmul.f32 %v1690, %v189
    %v1719 = vmul.f32 %v1694, %v189
    %v1720 = vmul.f32 %v1698, %v189
    %v1721 = vmul.f32 %v1702, %v189
    %v1722 = vmul.f32 %v1706, %v189
    %v1723 = vcombine.low %v1617, %v1619
    %v1724 = vcombine.high %v1617, %v1619
    %v1726 = vunpack.c.l.s4 1983009808
    %v1727 = vunpack.c.0.s8 %v1726
    %v1728 = vlaneseq
    %v1729 = vshrl.u32 %v1728, 7
    %v1730 = vsub.s32 %v1727, %v1729
    %v1731 = vrot.slane %v1723, %v1730
    %v1733 = vunpack.c.l.s4 1983009808
    %v1734 = vunpack.c.0.s8 %v1733
    %v1735 = vlaneseq
    %v1736 = vshrl.u32 %v1735, 7
    %v1737 = vsub.s32 %v1734, %v1736
    %v1738 = vrot.slane %v1724, %v1737
    %v1739 = vcombine.low %v1618, %v1620
    %v1740 = vcombine.high %v1618, %v1620
    %v1742 = vunpack.c.l.s4 1983009808
    %v1743 = vunpack.c.0.s8 %v1742
    %v1744 = vlaneseq
    %v1745 = vshrl.u32 %v1744, 7
    %v1746 = vsub.s32 %v1743, %v1745
    %v1747 = vrot.slane %v1739, %v1746
    %v1749 = vunpack.c.l.s4 1983009808
    %v1750 = vunpack.c.0.s8 %v1749
    %v1751 = vlaneseq
    %v1752 = vshrl.u32 %v1751, 7
    %v1753 = vsub.s32 %v1750, %v1752
    %v1754 = vrot.slane %v1740, %v1753
    %v1755 = vcombine.low %v1621, %v1623
    %v1756 = vcombine.high %v1621, %v1623
    %v1758 = vunpack.c.l.s4 1983009808
    %v1759 = vunpack.c.0.s8 %v1758
    %v1760 = vlaneseq
    %v1761 = vshrl.u32 %v1760, 7
    %v1762 = vsub.s32 %v1759, %v1761
    %v1763 = vrot.slane %v1755, %v1762
    %v1765 = vunpack.c.l.s4 1983009808
    %v1766 = vunpack.c.0.s8 %v1765
    %v1767 = vlaneseq
    %v1768 = vshrl.u32 %v1767, 7
    %v1769 = vsub.s32 %v1766, %v1768
    %v1770 = vrot.slane %v1756, %v1769
    %v1771 = vcombine.low %v1622, %v1624
    %v1772 = vcombine.high %v1622, %v1624
    %v1774 = vunpack.c.l.s4 1983009808
    %v1775 = vunpack.c.0.s8 %v1774
    %v1776 = vlaneseq
    %v1777 = vshrl.u32 %v1776, 7
    %v1778 = vsub.s32 %v1775, %v1777
    %v1779 = vrot.slane %v1771, %v1778
    %v1781 = vunpack.c.l.s4 1983009808
    %v1782 = vunpack.c.0.s8 %v1781
    %v1783 = vlaneseq
    %v1784 = vshrl.u32 %v1783, 7
    %v1785 = vsub.s32 %v1782, %v1784
    %v1786 = vrot.slane %v1772, %v1785
    %v1787 = vcombine.low %v1731, %v1747
    %v1788 = vcombine.high %v1731, %v1747
    %v1790 = vunpack.c.l.s4 1934713408
    %v1791 = vunpack.c.0.s8 %v1790
    %v1792 = vlaneseq
    %v1793 = vshrl.u32 %v1792, 7
    %v1794 = vsub.s32 %v1791, %v1793
    %v1795 = vrot.slane %v1787, %v1794
    %v1797 = vunpack.c.l.s4 1934713408
    %v1798 = vunpack.c.0.s8 %v1797
    %v1799 = vlaneseq
    %v1800 = vshrl.u32 %v1799, 7
    %v1801 = vsub.s32 %v1798, %v1800
    %v1802 = vrot.slane %v1788, %v1801
    %v1803 = vcombine.low %v1738, %v1754
    %v1804 = vcombine.high %v1738, %v1754
    %v1806 = vunpack.c.l.s4 1934713408
    %v1807 = vunpack.c.0.s8 %v1806
    %v1808 = vlaneseq
    %v1809 = vshrl.u32 %v1808, 7
    %v1810 = vsub.s32 %v1807, %v1809
    %v1811 = vrot.slane %v1803, %v1810
    %v1813 = vunpack.c.l.s4 1934713408
    %v1814 = vunpack.c.0.s8 %v1813
    %v1815 = vlaneseq
    %v1816 = vshrl.u32 %v1815, 7
    %v1817 = vsub.s32 %v1814, %v1816
    %v1818 = vrot.slane %v1804, %v1817
    %v1819 = vcombine.low %v1763, %v1779
    %v1820 = vcombine.high %v1763, %v1779
    %v1822 = vunpack.c.l.s4 1934713408
    %v1823 = vunpack.c.0.s8 %v1822
    %v1824 = vlaneseq
    %v1825 = vshrl.u32 %v1824, 7
    %v1826 = vsub.s32 %v1823, %v1825
    %v1827 = vrot.slane %v1819, %v1826
    %v1829 = vunpack.c.l.s4 1934713408
    %v1830 = vunpack.c.0.s8 %v1829
    %v1831 = vlaneseq
    %v1832 = vshrl.u32 %v1831, 7
    %v1833 = vsub.s32 %v1830, %v1832
    %v1834 = vrot.slane %v1820, %v1833
    %v1835 = vcombine.low %v1770, %v1786
    %v1836 = vcombine.high %v1770, %v1786
    %v1838 = vunpack.c.l.s4 1934713408
    %v1839 = vunpack.c.0.s8 %v1838
    %v1840 = vlaneseq
    %v1841 = vshrl.u32 %v1840, 7
    %v1842 = vsub.s32 %v1839, %v1841
    %v1843 = vrot.slane %v1835, %v1842
    %v1845 = vunpack.c.l.s4 1934713408
    %v1846 = vunpack.c.0.s8 %v1845
    %v1847 = vlaneseq
    %v1848 = vshrl.u32 %v1847, 7
    %v1849 = vsub.s32 %v1846, %v1848
    %v1850 = vrot.slane %v1836, %v1849
    %v1851 = vcombine.low %v1795, %v1827
    %v1852 = vcombine.high %v1795, %v1827
    %v1853 = vcombine.low %v1802, %v1834
    %v1854 = vcombine.high %v1802, %v1834
    %v1855 = vcombine.low %v1811, %v1843
    %v1856 = vcombine.high %v1811, %v1843
    %v1857 = vcombine.low %v1818, %v1850
    %v1858 = vcombine.high %v1818, %v1850
    %1860 = vrot.lane.b32.xlu0 %v1852, 4
    %v1861 = vpop.permute.xlu0 %1860
    %1864 = vrot.lane.b32.xlu0 %v1853, 8
    %v1865 = vpop.permute.xlu0 %1864
    %1868 = vrot.lane.b32.xlu0 %v1854, 12
    %v1869 = vpop.permute.xlu0 %1868
    %1872 = vrot.lane.b32.xlu0 %v1855, 16
    %v1873 = vpop.permute.xlu0 %1872
    %1876 = vrot.lane.b32.xlu0 %v1856, 20
    %v1877 = vpop.permute.xlu0 %1876
    %1880 = vrot.lane.b32.xlu0 %v1857, 24
    %v1881 = vpop.permute.xlu0 %1880
    %1884 = vrot.lane.b32.xlu0 %v1858, 28
    %v1885 = vpop.permute.xlu0 %1884
    %v1887 = vsel %vm546, %v1851, %v1861
    %v1888 = vsel %vm962, %v1887, %v1865
    %v1889 = vsel %vm964, %v1888, %v1869
    %v1890 = vsel %vm113, %v1889, %v1873
    %v1891 = vsel %vm967, %v1890, %v1877
    %v1892 = vsel %vm969, %v1891, %v1881
    %v1893 = vsel %vm971, %v1892, %v1885
    %v1902 = vcombine.low %v1715, %v1716
    %v1903 = vcombine.low %v1717, %v1718
    %v1904 = vcombine.low %v1719, %v1720
    %v1905 = vcombine.low %v1721, %v1722
    %v1911 = vsel %vm244, %v1893, 0
    %1913 = vmatprep.subr.mxu0 0.0
    %1914 = vmatpush1.msra.mxu0 %v1902
    %1915 = vmatprep.subr.mxu0 0.0
    %1916 = vmatpush1.msra.mxu0 %v1903
    %1917 = vmatprep.subr.mxu0 0.0
    %1918 = vmatpush1.msra.mxu0 %v1904
    %1919 = vmatprep.subr.mxu0 0.0
    %1920 = vmatpush1.msra.mxu0 %v1905
    %1921 = vmatprep.subr.mxu0 0.0
    %1922 = vmatpush1.msra.mxu0 0.0
    %1923 = vmatprep.subr.mxu0 0.0
    %1924 = vmatpush1.msra.mxu0 0.0
    %1925 = vmatprep.subr.mxu0 0.0
    %1926 = vmatpush1.msra.mxu0 0.0
    %1927 = vmatprep.subr.mxu0 0.0
    %1928 = vmatpush1.msra.mxu0 0.0
    %1929 = vmatprep.subr.mxu0 0.0
    %1930 = vmatpush1.msra.mxu0 0.0
    %1931 = vmatprep.subr.mxu0 0.0
    %1932 = vmatpush1.msra.mxu0 0.0
    %1933 = vmatprep.subr.mxu0 0.0
    %1934 = vmatpush1.msra.mxu0 0.0
    %1935 = vmatprep.subr.mxu0 0.0
    %1936 = vmatpush1.msra.mxu0 0.0
    %1937 = vmatprep.subr.mxu0 0.0
    %1938 = vmatpush1.msra.mxu0 0.0
    %1939 = vmatprep.subr.mxu0 0.0
    %1940 = vmatpush1.msra.mxu0 0.0
    %1941 = vmatprep.subr.mxu0 0.0
    %1942 = vmatpush1.msra.mxu0 0.0
    %1943 = vmatprep.subr.mxu0 0.0
    %1944 = vmatpush1.msra.mxu0 0.0
    %1945 = vmatprep.subr.mxu0 0.0
    %1946 = vmatpush1.msra.mxu0 0.0
    %1947 = vmatprep.subr.mxu0 0.0
    %1948 = vmatpush1.msra.mxu0 0.0
    %1949 = vmatprep.subr.mxu0 0.0
    %1950 = vmatpush1.msra.mxu0 0.0
    %1951 = vmatprep.subr.mxu0 0.0
    %1952 = vmatpush1.msra.mxu0 0.0
    %1953 = vmatprep.subr.mxu0 0.0
    %1954 = vmatpush1.msra.mxu0 0.0
    %1955 = vmatprep.subr.mxu0 0.0
    %1956 = vmatpush1.msra.mxu0 0.0
    %1957 = vmatprep.subr.mxu0 0.0
    %1958 = vmatpush1.msra.mxu0 0.0
    %1959 = vmatprep.subr.mxu0 0.0
    %1960 = vmatpush1.msra.mxu0 0.0
    %1961 = vmatprep.subr.mxu0 0.0
    %1962 = vmatpush1.msra.mxu0 0.0
    %1963 = vmatprep.subr.mxu0 0.0
    %1964 = vmatpush1.msra.mxu0 0.0
    %1965 = vmatprep.subr.mxu0 0.0
    %1966 = vmatpush1.msra.mxu0 0.0
    %1967 = vmatprep.subr.mxu0 0.0
    %1968 = vmatpush1.msra.mxu0 0.0
    %1969 = vmatprep.subr.mxu0 0.0
    %1970 = vmatpush1.msra.mxu0 0.0
    %1971 = vmatprep.subr.mxu0 0.0
    %1972 = vmatpush1.msra.mxu0 0.0
    %1973 = vmatprep.subr.mxu0 0.0
    %1974 = vmatpush1.msra.mxu0 0.0
    %1975 = vmatprep.subr.mxu0 0.0
    %1976 = vmatpush1.msra.mxu0 0.0
    %1977 = vmatprep.mubr.f32.mxu0 0.0
    %1978 = vmatmul.mubr.f32.gmra.mrb[0].mxu0 %v1911
    %v1979 = vpop.f32.mrb[0].mxu0
    %v1980 = vadd.f32 0.0, %v1979
    %v1981 = vpop.f32.mrb[0].mxu0
    %1982 = vdwg.mxu0
    %1983 = vmatprep.subr.mxu0 0.0
    %1984 = vmatpush1.msra.mxu0 %v190
    %1985 = vmatprep.subr.mxu0 0.0
    %1986 = vmatpush1.msra.mxu0 %v191
    %1987 = vmatprep.subr.mxu0 0.0
    %1988 = vmatpush1.msra.mxu0 %v192
    %1989 = vmatprep.subr.mxu0 0.0
    %1990 = vmatpush1.msra.mxu0 %v193
    %1991 = vmatprep.subr.mxu0 0.0
    %1992 = vmatpush1.msra.mxu0 %v194
    %1993 = vmatprep.subr.mxu0 0.0
    %1994 = vmatpush1.msra.mxu0 %v195
    %1995 = vmatprep.subr.mxu0 0.0
    %1996 = vmatpush1.msra.mxu0 %v196
    %1997 = vmatprep.subr.mxu0 0.0
    %1998 = vmatpush1.msra.mxu0 %v197
    %1999 = vmatprep.subr.mxu0 0.0
    %2000 = vmatpush1.msra.mxu0 %v198
    %2001 = vmatprep.subr.mxu0 0.0
    %2002 = vmatpush1.msra.mxu0 %v199
    %2003 = vmatprep.subr.mxu0 0.0
    %2004 = vmatpush1.msra.mxu0 %v200
    %2005 = vmatprep.subr.mxu0 0.0
    %2006 = vmatpush1.msra.mxu0 %v201
    %2007 = vmatprep.subr.mxu0 0.0
    %2008 = vmatpush1.msra.mxu0 %v202
    %2009 = vmatprep.subr.mxu0 0.0
    %2010 = vmatpush1.msra.mxu0 %v203
    %2011 = vmatprep.subr.mxu0 0.0
    %2012 = vmatpush1.msra.mxu0 %v204
    %2013 = vmatprep.subr.mxu0 0.0
    %2014 = vmatpush1.msra.mxu0 %v205
    %2015 = vmatprep.subr.mxu0 0.0
    %2016 = vmatpush1.msra.mxu0 0.0
    %2017 = vmatprep.subr.mxu0 0.0
    %2018 = vmatpush1.msra.mxu0 0.0
    %2019 = vmatprep.subr.mxu0 0.0
    %2020 = vmatpush1.msra.mxu0 0.0
    %2021 = vmatprep.subr.mxu0 0.0
    %2022 = vmatpush1.msra.mxu0 0.0
    %2023 = vmatprep.subr.mxu0 0.0
    %2024 = vmatpush1.msra.mxu0 0.0
    %2025 = vmatprep.subr.mxu0 0.0
    %2026 = vmatpush1.msra.mxu0 0.0
    %2027 = vmatprep.subr.mxu0 0.0
    %2028 = vmatpush1.msra.mxu0 0.0
    %2029 = vmatprep.subr.mxu0 0.0
    %2030 = vmatpush1.msra.mxu0 0.0
    %2031 = vmatprep.subr.mxu0 0.0
    %2032 = vmatpush1.msra.mxu0 0.0
    %2033 = vmatprep.subr.mxu0 0.0
    %2034 = vmatpush1.msra.mxu0 0.0
    %2035 = vmatprep.subr.mxu0 0.0
    %2036 = vmatpush1.msra.mxu0 0.0
    %2037 = vmatprep.subr.mxu0 0.0
    %2038 = vmatpush1.msra.mxu0 0.0
    %2039 = vmatprep.subr.mxu0 0.0
    %2040 = vmatpush1.msra.mxu0 0.0
    %2041 = vmatprep.subr.mxu0 0.0
    %2042 = vmatpush1.msra.mxu0 0.0
    %2043 = vmatprep.subr.mxu0 0.0
    %2044 = vmatpush1.msra.mxu0 0.0
    %2045 = vmatprep.subr.mxu0 0.0
    %2046 = vmatpush1.msra.mxu0 0.0
    %2047 = vmatprep.mubr.f32.mxu0 0.0
    %2048 = vmatmul.mubr.f32.gmra.mrb[0].mxu0 %v1980
    %v2049 = vpop.f32.mrb[0].mxu0
    %v2050 = vadd.f32 %v1144, %v2049
    %v2051 = vpop.f32.mrb[0].mxu0
    %2052 = vdwg.mxu0
    %v2053 = vmul.f32 %v2050, 0.01
    %v2054 = vmax.f32 %v2050, %v2053
    %v2055 = vld [vmem:[#allocation7 + $0xa0] sm:$0xff]
    %v2056 = vld [vmem:[#allocation7 + $0xb0] sm:$0xff]
    %v2057 = vld [vmem:[#allocation7 + $0xc0] sm:$0xff]
    %v2058 = vld [vmem:[#allocation7 + $0xd0] sm:$0xff]
    %v2059 = vld [vmem:[#allocation7 + $0xe5] ss:$0 sm:$0xff]
    %v2061 = vsel %vm244, %v2054, 0
    %2063 = vmatprep.subr.mxu0 0.0
    %2064 = vmatpush1.msra.mxu0 %v2055
    %2065 = vmatprep.subr.mxu0 0.0
    %2066 = vmatpush1.msra.mxu0 %v2056
    %2067 = vmatprep.subr.mxu0 0.0
    %2068 = vmatpush1.msra.mxu0 %v2057
    %2069 = vmatprep.subr.mxu0 0.0
    %2070 = vmatpush1.msra.mxu0 %v2058
    %2071 = vmatprep.subr.mxu0 0.0
    %2072 = vmatpush1.msra.mxu0 0.0
    %2073 = vmatprep.subr.mxu0 0.0
    %2074 = vmatpush1.msra.mxu0 0.0
    %2075 = vmatprep.subr.mxu0 0.0
    %2076 = vmatpush1.msra.mxu0 0.0
    %2077 = vmatprep.subr.mxu0 0.0
    %2078 = vmatpush1.msra.mxu0 0.0
    %2079 = vmatprep.subr.mxu0 0.0
    %2080 = vmatpush1.msra.mxu0 0.0
    %2081 = vmatprep.subr.mxu0 0.0
    %2082 = vmatpush1.msra.mxu0 0.0
    %2083 = vmatprep.subr.mxu0 0.0
    %2084 = vmatpush1.msra.mxu0 0.0
    %2085 = vmatprep.subr.mxu0 0.0
    %2086 = vmatpush1.msra.mxu0 0.0
    %2087 = vmatprep.subr.mxu0 0.0
    %2088 = vmatpush1.msra.mxu0 0.0
    %2089 = vmatprep.subr.mxu0 0.0
    %2090 = vmatpush1.msra.mxu0 0.0
    %2091 = vmatprep.subr.mxu0 0.0
    %2092 = vmatpush1.msra.mxu0 0.0
    %2093 = vmatprep.subr.mxu0 0.0
    %2094 = vmatpush1.msra.mxu0 0.0
    %2095 = vmatprep.subr.mxu0 0.0
    %2096 = vmatpush1.msra.mxu0 0.0
    %2097 = vmatprep.subr.mxu0 0.0
    %2098 = vmatpush1.msra.mxu0 0.0
    %2099 = vmatprep.subr.mxu0 0.0
    %2100 = vmatpush1.msra.mxu0 0.0
    %2101 = vmatprep.subr.mxu0 0.0
    %2102 = vmatpush1.msra.mxu0 0.0
    %2103 = vmatprep.subr.mxu0 0.0
    %2104 = vmatpush1.msra.mxu0 0.0
    %2105 = vmatprep.subr.mxu0 0.0
    %2106 = vmatpush1.msra.mxu0 0.0
    %2107 = vmatprep.subr.mxu0 0.0
    %2108 = vmatpush1.msra.mxu0 0.0
    %2109 = vmatprep.subr.mxu0 0.0
    %2110 = vmatpush1.msra.mxu0 0.0
    %2111 = vmatprep.subr.mxu0 0.0
    %2112 = vmatpush1.msra.mxu0 0.0
    %2113 = vmatprep.subr.mxu0 0.0
    %2114 = vmatpush1.msra.mxu0 0.0
    %2115 = vmatprep.subr.mxu0 0.0
    %2116 = vmatpush1.msra.mxu0 0.0
    %2117 = vmatprep.subr.mxu0 0.0
    %2118 = vmatpush1.msra.mxu0 0.0
    %2119 = vmatprep.subr.mxu0 0.0
    %2120 = vmatpush1.msra.mxu0 0.0
    %2121 = vmatprep.subr.mxu0 0.0
    %2122 = vmatpush1.msra.mxu0 0.0
    %2123 = vmatprep.subr.mxu0 0.0
    %2124 = vmatpush1.msra.mxu0 0.0
    %2125 = vmatprep.subr.mxu0 0.0
    %2126 = vmatpush1.msra.mxu0 0.0
    %2127 = vmatprep.mubr.f32.mxu0 0.0
    %2128 = vmatmul.mubr.f32.gmra.mrb[0].mxu0 %v2061
    %v2129 = vpop.f32.mrb[0].mxu0
    %v2130 = vadd.f32 %v2059, %v2129
    %v2131 = vpop.f32.mrb[0].mxu0
    %2132 = vdwg.mxu0
    %v2133 = vrot.slane %v2130, 4
    %v2134 = vadd.f32 %v2130, %v2133
    %v2135 = vrot.slane %v2134, 2
    %v2136 = vadd.f32 %v2134, %v2135
    %v2137 = vrot.slane %v2136, 1
    %v2138 = vadd.f32 %v2136, %v2137
    %v2139 = vrcp.pop 8.0
    %v2140 = vmul.f32 %v2138, %v2139
    %2141 = vst [vmem:[#allocation8] sm:$0x1] %v2140
    // Predicated region
    $region26: #{tpu_custom_call.1} parent=1 // pred_check
      _
    $region27: #{tpu_custom_call.1} parent=1 // pred_check_branch
      %2143 = sbr.rel (0) target = $region29
    $region28: #{tpu_custom_call.1} parent=1 // pred_region
      %s2145 = ssub.s32 16, 16
      %2146 = vsyncadd [#allocation4], %s2145
      %s2148 = sshll.u32 [#allocation8], 4
      %s2149 = int_to_ptr.vmem [resolvable:$true] %s2148
      %2151 = dma.vmem_to_hbm [thread:$0]  %s2149, 16, %s3, [#allocation4]
    $region29: #{tpu_custom_call.1} parent=1 // pred_fallthru
      _
    // Predicated region
    $region30: #{tpu_custom_call.1} parent=1 // pred_check
      _
    $region31: #{tpu_custom_call.1} parent=1 // pred_check_branch
      %2153 = sbr.rel (0) target = $region33
    $region32: #{tpu_custom_call.1} parent=1 // pred_region
      %2154 = dma.done [#allocation4], 16
    $region33: #{tpu_custom_call.1} parent=1 // pred_fallthru
      _
    %2155 = vsyncpa [#allocation3], 1
    %2156 = vsyncpa [#allocation6], 1
    %2157 = vsyncpa [#allocation4], 1

</llo_original>
